<compile_context>
chip_gen: v7x
topology: tpu7x:2x2x1
jax: 0.10.0
libtpu: 0.0.40
codegen_flags: <defaults>
</compile_context>

<pallas_src>
import math

import jax
import jax.numpy as jnp
from jax import lax
from jax.experimental import pallas as pl
from jax.experimental.pallas import tpu as pltpu

FEATURE_DIM = 32     # args.feature_dim
N_HIDDEN_1 = 64      # args.n_hidden_1
N_HIDDEN_2 = 32      # args.n_hidden_2
OUT_DIM = 4          # args.out_dim
N_SOURCES = 5        # 5 pre-embedding sources
BN_EPS = 1e-5


def _round_up(x, m):
    return ((x + m - 1) // m) * m


def _choose_tile(n, cap):
    """Sublane-aligned batch tile: few large steps, but >=2 steps when the
    problem is big enough so both v7x TensorCores get work."""
    n8 = _round_up(max(n, 1), 8)
    if n8 <= 16:
        return n8
    if n8 <= cap:
        return _round_up(-(-n8 // 2), 8)        # roughly split in two
    return cap


# ----------------------------------------------------------------------------
# Kernel 1: single-head self-attention fusion (MultiheadAttention, num_heads=1,
# batch_first) + mean over the 5 sources.  Input is source-major (S, N, D);
# each grid step handles TILE_N drugs.  QKV weights are fused to (D, 3D).
# ----------------------------------------------------------------------------
def attention_fusion_kernel(x_ref, wqkv_ref, bqkv_ref, wo_ref, bo_ref, out_ref):
    d = x_ref.shape[-1]
    wqkv = wqkv_ref[...]                                    # (D, 3D)
    bqkv = bqkv_ref[...]                                    # (1, 3D)

    qs, ks, vs = [], [], []
    for s in range(N_SOURCES):
        x_s = x_ref[s].astype(jnp.float32)                  # (tn, D)
        qkv = jnp.dot(x_s, wqkv, preferred_element_type=jnp.float32) + bqkv
        qs.append(qkv[:, :d])
        ks.append(qkv[:, d:2 * d])
        vs.append(qkv[:, 2 * d:3 * d])

    scale = 1.0 / math.sqrt(d)
    ctx_sum = None
    for i in range(N_SOURCES):
        # scores_ij = <q_i, k_j>/sqrt(D) per drug row -> (tn, 1)
        srow = [jnp.sum(qs[i] * ks[j], axis=-1, keepdims=True) * scale
                for j in range(N_SOURCES)]
        m = srow[0]
        for j in range(1, N_SOURCES):
            m = jnp.maximum(m, srow[j])
        p = [jnp.exp(sj - m) for sj in srow]
        denom = p[0]
        for j in range(1, N_SOURCES):
            denom = denom + p[j]
        inv = pl.reciprocal(denom, approx=True)             # EUP slot
        ctx_i = (p[0] * inv) * vs[0]
        for j in range(1, N_SOURCES):
            ctx_i = ctx_i + (p[j] * inv) * vs[j]
        ctx_sum = ctx_i if ctx_sum is None else ctx_sum + ctx_i

    ctx_mean = ctx_sum * (1.0 / N_SOURCES)
    # mean over sources commutes with the linear output projection
    out_ref[...] = jnp.dot(ctx_mean, wo_ref[...],
                           preferred_element_type=jnp.float32) + bo_ref[...]


def attention_fusion(x_src_major, attn_fused, *, tile_cap=1024):
    wqkv, bqkv, wo, bo = attn_fused
    s, n, d = x_src_major.shape
    tile_n = _choose_tile(n, tile_cap)
    n_pad = _round_up(n, tile_n)
    if n_pad != n:
        x_src_major = jnp.pad(x_src_major, ((0, 0), (0, n_pad - n), (0, 0)))

    weight_spec = lambda a: pl.BlockSpec(a.shape, lambda i: (0,) * a.ndim)
    out = pl.pallas_call(
        attention_fusion_kernel,
        out_shape=jax.ShapeDtypeStruct((n_pad, d), jnp.float32),
        grid=(n_pad // tile_n,),
        in_specs=[pl.BlockSpec((s, tile_n, d), lambda i: (0, i, 0)),
                  weight_spec(wqkv), weight_spec(bqkv),
                  weight_spec(wo), weight_spec(bo)],
        out_specs=pl.BlockSpec((tile_n, d), lambda i: (i, 0)),
        compiler_params=pltpu.CompilerParams(dimension_semantics=("parallel",)),
    )(x_src_major, wqkv, bqkv, wo, bo)
    return out[:n]


# ----------------------------------------------------------------------------
# Kernel 2: DDI predictor on drug-pair rows with BatchNorm(eval) pre-folded:
#   Linear(+folded BN) -> ReLU -> Linear(+folded BN) -> ReLU -> Linear -> sigmoid
# ----------------------------------------------------------------------------
def ddi_mlp_kernel(x_ref, w1_ref, b1_ref, w2_ref, b2_ref, w3_ref, b3_ref, out_ref):
    x = x_ref[...].astype(jnp.float32)                       # (tb, 2D)
    h = jnp.dot(x, w1_ref[...], preferred_element_type=jnp.float32) + b1_ref[...]
    h = jnp.maximum(h, 0.0)
    h = jnp.dot(h, w2_ref[...], preferred_element_type=jnp.float32) + b2_ref[...]
    h = jnp.maximum(h, 0.0)
    logits = jnp.dot(h, w3_ref[...], preferred_element_type=jnp.float32) + b3_ref[...]
    out_ref[...] = jax.nn.sigmoid(logits)                     # predict path


def ddi_predict(pair_x, folded_params, *, tile_cap=1024):
    b, in_dim = pair_x.shape
    tb = _choose_tile(b, tile_cap)
    b_pad = _round_up(b, tb)
    if b_pad != b:
        pair_x = jnp.pad(pair_x, ((0, b_pad - b), (0, 0)))

    weight_spec = lambda a: pl.BlockSpec(a.shape, lambda i: (0,) * a.ndim)
    out = pl.pallas_call(
        ddi_mlp_kernel,
        out_shape=jax.ShapeDtypeStruct((b_pad, OUT_DIM), jnp.float32),
        grid=(b_pad // tb,),
        in_specs=[pl.BlockSpec((tb, in_dim), lambda i: (i, 0))]
        + [weight_spec(p) for p in folded_params],
        out_specs=pl.BlockSpec((tb, OUT_DIM), lambda i: (i, 0)),
        compiler_params=pltpu.CompilerParams(dimension_semantics=("parallel",)),
    )(pair_x, *folded_params)
    return out[:b]


# ----------------------------------------------------------------------------
# Model wrapper ('predict' mode of My_Model)
# ----------------------------------------------------------------------------
def _fold_bn(w, b, gamma, beta, rmean, rvar):
    scale = gamma * lax.rsqrt(rvar + BN_EPS)                  # (1, H)
    return w * scale, (b - rmean) * scale + beta


def my_model_predict(test_data, pre_embedding, attn_params, mlp_params):
    wq, wk, wv, bq, bk, bv, wo, bo = attn_params
    wqkv = jnp.concatenate([wq, wk, wv], axis=1)              # (D, 3D)
    bqkv = jnp.concatenate([bq, bk, bv], axis=1)              # (1, 3D)

    # get_fusion_data (fusion_type == 'attention'); source-major layout
    x = jnp.stack(pre_embedding, axis=0).astype(jnp.float32)  # (S, N, D)
    drug_embedding = attention_fusion(x, (wqkv, bqkv, wo, bo))  # (N, D)

    (w1, b1, g1, be1, rm1, rv1,
     w2, b2, g2, be2, rm2, rv2, w3, b3) = mlp_params
    w1f, b1f = _fold_bn(w1, b1, g1, be1, rm1, rv1)            # BN(eval) folded
    w2f, b2f = _fold_bn(w2, b2, g2, be2, rm2, rv2)

    # TODO(synk): the drug-pair gather/concat stays in XLA; fusing it into the
    # MLP pallas_call would need an in-kernel dynamic row gather (DMA gather or
    # scalar-prefetch Element indexing), kept outside for robustness.
    d1 = test_data[:, 0].astype(jnp.int32)
    d2 = test_data[:, 1].astype(jnp.int32)
    pair_x = jnp.concatenate([drug_embedding[d1], drug_embedding[d2]], axis=1)
    return ddi_predict(pair_x, (w1f, b1f, w2f, b2f, w3, b3))


# ----------------------------------------------------------------------------
# Pure-JAX reference (sanity check only)
# ----------------------------------------------------------------------------
def reference_predict(test_data, pre_embedding, attn_params, mlp_params):
    wq, wk, wv, bq, bk, bv, wo, bo = attn_params
    x = jnp.stack(pre_embedding, axis=1).astype(jnp.float32)  # (N, S, D)
    hp = jax.lax.Precision.HIGHEST
    q = jnp.einsum('nsd,de->nse', x, wq, precision=hp) + bq
    k = jnp.einsum('nsd,de->nse', x, wk, precision=hp) + bk
    v = jnp.einsum('nsd,de->nse', x, wv, precision=hp) + bv
    s = jnp.einsum('nqd,nkd->nqk', q, k, precision=hp) / jnp.sqrt(jnp.float32(x.shape[-1]))
    a = jax.nn.softmax(s, axis=-1)
    ctx = jnp.einsum('nqk,nkd->nqd', a, v, precision=hp)
    emb = (jnp.einsum('nsd,de->nse', ctx, wo, precision=hp) + bo).mean(axis=1)
    d1 = test_data[:, 0].astype(jnp.int32)
    d2 = test_data[:, 1].astype(jnp.int32)
    h = jnp.concatenate([emb[d1], emb[d2]], axis=1)
    (w1, b1, g1, be1, rm1, rv1, w2, b2, g2, be2, rm2, rv2, w3, b3) = mlp_params
    h = jnp.dot(h, w1, precision=hp) + b1
    h = jnp.maximum((h - rm1) / jnp.sqrt(rv1 + BN_EPS) * g1 + be1, 0.0)
    h = jnp.dot(h, w2, precision=hp) + b2
    h = jnp.maximum((h - rm2) / jnp.sqrt(rv2 + BN_EPS) * g2 + be2, 0.0)
    return jax.nn.sigmoid(jnp.dot(h, w3, precision=hp) + b3)


if __name__ == "__main__":
    key = jax.random.PRNGKey(0)
    n_drugs, batch, d = 19, 37, FEATURE_DIM   # non-tile-multiples: exercise padding
    keys = jax.random.split(key, 32)

    # 5 pre-embedding sources, each (N_drugs, D)
    pre_embedding = [0.1 * jax.random.normal(keys[i], (n_drugs, d), jnp.float32)
                     for i in range(N_SOURCES)]
    # drug-pair index table (B, 2)
    test_data = jax.random.randint(keys[5], (batch, 2), 0, n_drugs, jnp.int32)

    # MultiheadAttention params (embed_dim=D, num_heads=1), math orientation x @ W + b
    attn_params = (
        0.1 * jax.random.normal(keys[6], (d, d), jnp.float32),   # Wq
        0.1 * jax.random.normal(keys[7], (d, d), jnp.float32),   # Wk
        0.1 * jax.random.normal(keys[8], (d, d), jnp.float32),   # Wv
        0.1 * jax.random.normal(keys[9], (1, d), jnp.float32),   # bq
        0.1 * jax.random.normal(keys[10], (1, d), jnp.float32),  # bk
        0.1 * jax.random.normal(keys[11], (1, d), jnp.float32),  # bv
        0.1 * jax.random.normal(keys[12], (d, d), jnp.float32),  # Wo (out_proj)
        0.1 * jax.random.normal(keys[13], (1, d), jnp.float32),  # bo
    )

    # predictor params: pair_dim = 2 * feature_dim (fusion != concat)
    pair_dim = 2 * d
    mlp_params = (
        0.1 * jax.random.normal(keys[14], (pair_dim, N_HIDDEN_1), jnp.float32),   # W1
        0.1 * jax.random.normal(keys[15], (1, N_HIDDEN_1), jnp.float32),          # b1
        1.0 + 0.1 * jax.random.normal(keys[16], (1, N_HIDDEN_1), jnp.float32),    # bn1 gamma
        0.1 * jax.random.normal(keys[17], (1, N_HIDDEN_1), jnp.float32),          # bn1 beta
        0.05 * jax.random.normal(keys[18], (1, N_HIDDEN_1), jnp.float32),         # bn1 running_mean
        0.5 + jnp.abs(jax.random.normal(keys[19], (1, N_HIDDEN_1), jnp.float32)), # bn1 running_var
        0.1 * jax.random.normal(keys[20], (N_HIDDEN_1, N_HIDDEN_2), jnp.float32), # W2
        0.1 * jax.random.normal(keys[21], (1, N_HIDDEN_2), jnp.float32),          # b2
        1.0 + 0.1 * jax.random.normal(keys[22], (1, N_HIDDEN_2), jnp.float32),    # bn2 gamma
        0.1 * jax.random.normal(keys[23], (1, N_HIDDEN_2), jnp.float32),          # bn2 beta
        0.05 * jax.random.normal(keys[24], (1, N_HIDDEN_2), jnp.float32),         # bn2 running_mean
        0.5 + jnp.abs(jax.random.normal(keys[25], (1, N_HIDDEN_2), jnp.float32)), # bn2 running_var
        0.1 * jax.random.normal(keys[26], (N_HIDDEN_2, OUT_DIM), jnp.float32),    # W3
        0.1 * jax.random.normal(keys[27], (1, OUT_DIM), jnp.float32),             # b3
    )

    out = my_model_predict(test_data, pre_embedding, attn_params, mlp_params)
    out = jax.block_until_ready(out)

    ref = reference_predict(test_data, pre_embedding, attn_params, mlp_params)
    assert out.shape == (batch, OUT_DIM)
    assert bool(jnp.allclose(out, ref, rtol=1e-2, atol=1e-2)), "mismatch vs reference"

    # TODO(synk): training-mode BatchNorm (batch statistics) for the
    # 'calc_ddi_loss' mode is not implemented; eval (running-stats) semantics only.
    print("KERNEL_OK")
</pallas_src>

<mosaic_0001>
module attributes {stable_mosaic.version = 11 : i64} {
  func.func @attention_fusion_kernel(%arg0: i32, %arg1: memref<5x16x32xf32, #tpu.memory_space<vmem>>, %arg2: memref<32x96xf32, #tpu.memory_space<vmem>>, %arg3: memref<1x96xf32, #tpu.memory_space<vmem>>, %arg4: memref<32x32xf32, #tpu.memory_space<vmem>>, %arg5: memref<1x32xf32, #tpu.memory_space<vmem>>, %arg6: memref<16x32xf32, #tpu.memory_space<vmem>>) attributes {dimension_semantics = [#tpu.dimension_semantics<parallel>], iteration_bounds = array<i64: 2>, scalar_prefetch = 0 : i64, scratch_operands = 0 : i64, tpu.core_type = #tpu.core_type<tc>, window_params = [{transform_indices = @transform_0, window_bounds = array<i64: 5, 16, 32>}, {pipeline_mode = #tpu.pipeline_mode<synchronous>, transform_indices = @transform_1, window_bounds = array<i64: 32, 96>}, {pipeline_mode = #tpu.pipeline_mode<synchronous>, transform_indices = @transform_2, window_bounds = array<i64: 1, 96>}, {pipeline_mode = #tpu.pipeline_mode<synchronous>, transform_indices = @transform_3, window_bounds = array<i64: 32, 32>}, {pipeline_mode = #tpu.pipeline_mode<synchronous>, transform_indices = @transform_4, window_bounds = array<i64: 1, 32>}, {transform_indices = @transform_5, window_bounds = array<i64: 16, 32>}]} {
    %c0 = arith.constant 0 : index
    %c0_0 = arith.constant 0 : index
    %0 = vector.load %arg2[%c0, %c0_0] : memref<32x96xf32, #tpu.memory_space<vmem>>, vector<32x96xf32>
    %c0_1 = arith.constant 0 : index
    %c0_2 = arith.constant 0 : index
    %1 = vector.load %arg3[%c0_1, %c0_2] : memref<1x96xf32, #tpu.memory_space<vmem>>, vector<1x96xf32>
    %c0_3 = arith.constant 0 : index
    %c0_4 = arith.constant 0 : index
    %c0_5 = arith.constant 0 : index
    %2 = vector.load %arg1[%c0_3, %c0_4, %c0_5] : memref<5x16x32xf32, #tpu.memory_space<vmem>>, vector<1x16x32xf32>
    %3 = vector.shape_cast %2 : vector<1x16x32xf32> to vector<16x32xf32>
    %cst = arith.constant dense<0.000000e+00> : vector<16x96xf32>
    %4 = tpu.matmul %3, %0, %cst {dimension_numbers = #tpu.dot_dimension_numbers<[1], [0], [0], [1], [0, 0, 1, 1], [], []>} : vector<16x32xf32>, vector<32x96xf32>, vector<16x96xf32> -> vector<16x96xf32>
    %5 = vector.broadcast %1 : vector<1x96xf32> to vector<16x96xf32>
    %6 = arith.addf %4, %5 : vector<16x96xf32>
    %7 = vector.extract_strided_slice %6 {offsets = [0, 0], sizes = [16, 32], strides = [1, 1]} : vector<16x96xf32> to vector<16x32xf32>
    %8 = vector.extract_strided_slice %6 {offsets = [0, 32], sizes = [16, 32], strides = [1, 1]} : vector<16x96xf32> to vector<16x32xf32>
    %9 = vector.extract_strided_slice %6 {offsets = [0, 64], sizes = [16, 32], strides = [1, 1]} : vector<16x96xf32> to vector<16x32xf32>
    %c1 = arith.constant 1 : index
    %c0_6 = arith.constant 0 : index
    %c0_7 = arith.constant 0 : index
    %10 = vector.load %arg1[%c1, %c0_6, %c0_7] : memref<5x16x32xf32, #tpu.memory_space<vmem>>, vector<1x16x32xf32>
    %11 = vector.shape_cast %10 : vector<1x16x32xf32> to vector<16x32xf32>
    %cst_8 = arith.constant dense<0.000000e+00> : vector<16x96xf32>
    %12 = tpu.matmul %11, %0, %cst_8 {dimension_numbers = #tpu.dot_dimension_numbers<[1], [0], [0], [1], [0, 0, 1, 1], [], []>} : vector<16x32xf32>, vector<32x96xf32>, vector<16x96xf32> -> vector<16x96xf32>
    %13 = vector.broadcast %1 : vector<1x96xf32> to vector<16x96xf32>
    %14 = arith.addf %12, %13 : vector<16x96xf32>
    %15 = vector.extract_strided_slice %14 {offsets = [0, 0], sizes = [16, 32], strides = [1, 1]} : vector<16x96xf32> to vector<16x32xf32>
    %16 = vector.extract_strided_slice %14 {offsets = [0, 32], sizes = [16, 32], strides = [1, 1]} : vector<16x96xf32> to vector<16x32xf32>
    %17 = vector.extract_strided_slice %14 {offsets = [0, 64], sizes = [16, 32], strides = [1, 1]} : vector<16x96xf32> to vector<16x32xf32>
    %c2 = arith.constant 2 : index
    %c0_9 = arith.constant 0 : index
    %c0_10 = arith.constant 0 : index
    %18 = vector.load %arg1[%c2, %c0_9, %c0_10] : memref<5x16x32xf32, #tpu.memory_space<vmem>>, vector<1x16x32xf32>
    %19 = vector.shape_cast %18 : vector<1x16x32xf32> to vector<16x32xf32>
    %cst_11 = arith.constant dense<0.000000e+00> : vector<16x96xf32>
    %20 = tpu.matmul %19, %0, %cst_11 {dimension_numbers = #tpu.dot_dimension_numbers<[1], [0], [0], [1], [0, 0, 1, 1], [], []>} : vector<16x32xf32>, vector<32x96xf32>, vector<16x96xf32> -> vector<16x96xf32>
    %21 = vector.broadcast %1 : vector<1x96xf32> to vector<16x96xf32>
    %22 = arith.addf %20, %21 : vector<16x96xf32>
    %23 = vector.extract_strided_slice %22 {offsets = [0, 0], sizes = [16, 32], strides = [1, 1]} : vector<16x96xf32> to vector<16x32xf32>
    %24 = vector.extract_strided_slice %22 {offsets = [0, 32], sizes = [16, 32], strides = [1, 1]} : vector<16x96xf32> to vector<16x32xf32>
    %25 = vector.extract_strided_slice %22 {offsets = [0, 64], sizes = [16, 32], strides = [1, 1]} : vector<16x96xf32> to vector<16x32xf32>
    %c3 = arith.constant 3 : index
    %c0_12 = arith.constant 0 : index
    %c0_13 = arith.constant 0 : index
    %26 = vector.load %arg1[%c3, %c0_12, %c0_13] : memref<5x16x32xf32, #tpu.memory_space<vmem>>, vector<1x16x32xf32>
    %27 = vector.shape_cast %26 : vector<1x16x32xf32> to vector<16x32xf32>
    %cst_14 = arith.constant dense<0.000000e+00> : vector<16x96xf32>
    %28 = tpu.matmul %27, %0, %cst_14 {dimension_numbers = #tpu.dot_dimension_numbers<[1], [0], [0], [1], [0, 0, 1, 1], [], []>} : vector<16x32xf32>, vector<32x96xf32>, vector<16x96xf32> -> vector<16x96xf32>
    %29 = vector.broadcast %1 : vector<1x96xf32> to vector<16x96xf32>
    %30 = arith.addf %28, %29 : vector<16x96xf32>
    %31 = vector.extract_strided_slice %30 {offsets = [0, 0], sizes = [16, 32], strides = [1, 1]} : vector<16x96xf32> to vector<16x32xf32>
    %32 = vector.extract_strided_slice %30 {offsets = [0, 32], sizes = [16, 32], strides = [1, 1]} : vector<16x96xf32> to vector<16x32xf32>
    %33 = vector.extract_strided_slice %30 {offsets = [0, 64], sizes = [16, 32], strides = [1, 1]} : vector<16x96xf32> to vector<16x32xf32>
    %c4 = arith.constant 4 : index
    %c0_15 = arith.constant 0 : index
    %c0_16 = arith.constant 0 : index
    %34 = vector.load %arg1[%c4, %c0_15, %c0_16] : memref<5x16x32xf32, #tpu.memory_space<vmem>>, vector<1x16x32xf32>
    %35 = vector.shape_cast %34 : vector<1x16x32xf32> to vector<16x32xf32>
    %cst_17 = arith.constant dense<0.000000e+00> : vector<16x96xf32>
    %36 = tpu.matmul %35, %0, %cst_17 {dimension_numbers = #tpu.dot_dimension_numbers<[1], [0], [0], [1], [0, 0, 1, 1], [], []>} : vector<16x32xf32>, vector<32x96xf32>, vector<16x96xf32> -> vector<16x96xf32>
    %37 = vector.broadcast %1 : vector<1x96xf32> to vector<16x96xf32>
    %38 = arith.addf %36, %37 : vector<16x96xf32>
    %39 = vector.extract_strided_slice %38 {offsets = [0, 0], sizes = [16, 32], strides = [1, 1]} : vector<16x96xf32> to vector<16x32xf32>
    %40 = vector.extract_strided_slice %38 {offsets = [0, 32], sizes = [16, 32], strides = [1, 1]} : vector<16x96xf32> to vector<16x32xf32>
    %41 = vector.extract_strided_slice %38 {offsets = [0, 64], sizes = [16, 32], strides = [1, 1]} : vector<16x96xf32> to vector<16x32xf32>
    %42 = arith.mulf %7, %8 : vector<16x32xf32>
    %cst_18 = arith.constant dense<0.000000e+00> : vector<16xf32>
    %43 = vector.multi_reduction <add>, %42, %cst_18 [1] : vector<16x32xf32> to vector<16xf32>
    %44 = vector.shape_cast %43 : vector<16xf32> to vector<16x1xf32>
    %cst_19 = arith.constant 0.176776692 : f32
    %45 = vector.broadcast %cst_19 : f32 to vector<16x1xf32>
    %46 = arith.mulf %44, %45 : vector<16x1xf32>
    %47 = arith.mulf %7, %16 : vector<16x32xf32>
    %cst_20 = arith.constant dense<0.000000e+00> : vector<16xf32>
    %48 = vector.multi_reduction <add>, %47, %cst_20 [1] : vector<16x32xf32> to vector<16xf32>
    %49 = vector.shape_cast %48 : vector<16xf32> to vector<16x1xf32>
    %cst_21 = arith.constant 0.176776692 : f32
    %50 = vector.broadcast %cst_21 : f32 to vector<16x1xf32>
    %51 = arith.mulf %49, %50 : vector<16x1xf32>
    %52 = arith.mulf %7, %24 : vector<16x32xf32>
    %cst_22 = arith.constant dense<0.000000e+00> : vector<16xf32>
    %53 = vector.multi_reduction <add>, %52, %cst_22 [1] : vector<16x32xf32> to vector<16xf32>
    %54 = vector.shape_cast %53 : vector<16xf32> to vector<16x1xf32>
    %cst_23 = arith.constant 0.176776692 : f32
    %55 = vector.broadcast %cst_23 : f32 to vector<16x1xf32>
    %56 = arith.mulf %54, %55 : vector<16x1xf32>
    %57 = arith.mulf %7, %32 : vector<16x32xf32>
    %cst_24 = arith.constant dense<0.000000e+00> : vector<16xf32>
    %58 = vector.multi_reduction <add>, %57, %cst_24 [1] : vector<16x32xf32> to vector<16xf32>
    %59 = vector.shape_cast %58 : vector<16xf32> to vector<16x1xf32>
    %cst_25 = arith.constant 0.176776692 : f32
    %60 = vector.broadcast %cst_25 : f32 to vector<16x1xf32>
    %61 = arith.mulf %59, %60 : vector<16x1xf32>
    %62 = arith.mulf %7, %40 : vector<16x32xf32>
    %cst_26 = arith.constant dense<0.000000e+00> : vector<16xf32>
    %63 = vector.multi_reduction <add>, %62, %cst_26 [1] : vector<16x32xf32> to vector<16xf32>
    %64 = vector.shape_cast %63 : vector<16xf32> to vector<16x1xf32>
    %cst_27 = arith.constant 0.176776692 : f32
    %65 = vector.broadcast %cst_27 : f32 to vector<16x1xf32>
    %66 = arith.mulf %64, %65 : vector<16x1xf32>
    %67 = arith.maximumf %46, %51 : vector<16x1xf32>
    %68 = arith.maximumf %67, %56 : vector<16x1xf32>
    %69 = arith.maximumf %68, %61 : vector<16x1xf32>
    %70 = arith.maximumf %69, %66 : vector<16x1xf32>
    %71 = arith.subf %46, %70 : vector<16x1xf32>
    %72 = math.exp %71 : vector<16x1xf32>
    %73 = arith.subf %51, %70 : vector<16x1xf32>
    %74 = math.exp %73 : vector<16x1xf32>
    %75 = arith.subf %56, %70 : vector<16x1xf32>
    %76 = math.exp %75 : vector<16x1xf32>
    %77 = arith.subf %61, %70 : vector<16x1xf32>
    %78 = math.exp %77 : vector<16x1xf32>
    %79 = arith.subf %66, %70 : vector<16x1xf32>
    %80 = math.exp %79 : vector<16x1xf32>
    %81 = arith.addf %72, %74 : vector<16x1xf32>
    %82 = arith.addf %81, %76 : vector<16x1xf32>
    %83 = arith.addf %82, %78 : vector<16x1xf32>
    %84 = arith.addf %83, %80 : vector<16x1xf32>
    %85 = tpu.reciprocal %84 {approx = true} : vector<16x1xf32> -> vector<16x1xf32>
    %86 = arith.mulf %72, %85 : vector<16x1xf32>
    %87 = vector.broadcast %86 : vector<16x1xf32> to vector<16x32xf32>
    %88 = arith.mulf %87, %9 : vector<16x32xf32>
    %89 = arith.mulf %74, %85 : vector<16x1xf32>
    %90 = vector.broadcast %89 : vector<16x1xf32> to vector<16x32xf32>
    %91 = arith.mulf %90, %17 : vector<16x32xf32>
    %92 = arith.addf %88, %91 : vector<16x32xf32>
    %93 = arith.mulf %76, %85 : vector<16x1xf32>
    %94 = vector.broadcast %93 : vector<16x1xf32> to vector<16x32xf32>
    %95 = arith.mulf %94, %25 : vector<16x32xf32>
    %96 = arith.addf %92, %95 : vector<16x32xf32>
    %97 = arith.mulf %78, %85 : vector<16x1xf32>
    %98 = vector.broadcast %97 : vector<16x1xf32> to vector<16x32xf32>
    %99 = arith.mulf %98, %33 : vector<16x32xf32>
    %100 = arith.addf %96, %99 : vector<16x32xf32>
    %101 = arith.mulf %80, %85 : vector<16x1xf32>
    %102 = vector.broadcast %101 : vector<16x1xf32> to vector<16x32xf32>
    %103 = arith.mulf %102, %41 : vector<16x32xf32>
    %104 = arith.addf %100, %103 : vector<16x32xf32>
    %105 = arith.mulf %15, %8 : vector<16x32xf32>
    %cst_28 = arith.constant dense<0.000000e+00> : vector<16xf32>
    %106 = vector.multi_reduction <add>, %105, %cst_28 [1] : vector<16x32xf32> to vector<16xf32>
    %107 = vector.shape_cast %106 : vector<16xf32> to vector<16x1xf32>
    %cst_29 = arith.constant 0.176776692 : f32
    %108 = vector.broadcast %cst_29 : f32 to vector<16x1xf32>
    %109 = arith.mulf %107, %108 : vector<16x1xf32>
    %110 = arith.mulf %15, %16 : vector<16x32xf32>
    %cst_30 = arith.constant dense<0.000000e+00> : vector<16xf32>
    %111 = vector.multi_reduction <add>, %110, %cst_30 [1] : vector<16x32xf32> to vector<16xf32>
    %112 = vector.shape_cast %111 : vector<16xf32> to vector<16x1xf32>
    %cst_31 = arith.constant 0.176776692 : f32
    %113 = vector.broadcast %cst_31 : f32 to vector<16x1xf32>
    %114 = arith.mulf %112, %113 : vector<16x1xf32>
    %115 = arith.mulf %15, %24 : vector<16x32xf32>
    %cst_32 = arith.constant dense<0.000000e+00> : vector<16xf32>
    %116 = vector.multi_reduction <add>, %115, %cst_32 [1] : vector<16x32xf32> to vector<16xf32>
    %117 = vector.shape_cast %116 : vector<16xf32> to vector<16x1xf32>
    %cst_33 = arith.constant 0.176776692 : f32
    %118 = vector.broadcast %cst_33 : f32 to vector<16x1xf32>
    %119 = arith.mulf %117, %118 : vector<16x1xf32>
    %120 = arith.mulf %15, %32 : vector<16x32xf32>
    %cst_34 = arith.constant dense<0.000000e+00> : vector<16xf32>
    %121 = vector.multi_reduction <add>, %120, %cst_34 [1] : vector<16x32xf32> to vector<16xf32>
    %122 = vector.shape_cast %121 : vector<16xf32> to vector<16x1xf32>
    %cst_35 = arith.constant 0.176776692 : f32
    %123 = vector.broadcast %cst_35 : f32 to vector<16x1xf32>
    %124 = arith.mulf %122, %123 : vector<16x1xf32>
    %125 = arith.mulf %15, %40 : vector<16x32xf32>
    %cst_36 = arith.constant dense<0.000000e+00> : vector<16xf32>
    %126 = vector.multi_reduction <add>, %125, %cst_36 [1] : vector<16x32xf32> to vector<16xf32>
    %127 = vector.shape_cast %126 : vector<16xf32> to vector<16x1xf32>
    %cst_37 = arith.constant 0.176776692 : f32
    %128 = vector.broadcast %cst_37 : f32 to vector<16x1xf32>
    %129 = arith.mulf %127, %128 : vector<16x1xf32>
    %130 = arith.maximumf %109, %114 : vector<16x1xf32>
    %131 = arith.maximumf %130, %119 : vector<16x1xf32>
    %132 = arith.maximumf %131, %124 : vector<16x1xf32>
    %133 = arith.maximumf %132, %129 : vector<16x1xf32>
    %134 = arith.subf %109, %133 : vector<16x1xf32>
    %135 = math.exp %134 : vector<16x1xf32>
    %136 = arith.subf %114, %133 : vector<16x1xf32>
    %137 = math.exp %136 : vector<16x1xf32>
    %138 = arith.subf %119, %133 : vector<16x1xf32>
    %139 = math.exp %138 : vector<16x1xf32>
    %140 = arith.subf %124, %133 : vector<16x1xf32>
    %141 = math.exp %140 : vector<16x1xf32>
    %142 = arith.subf %129, %133 : vector<16x1xf32>
    %143 = math.exp %142 : vector<16x1xf32>
    %144 = arith.addf %135, %137 : vector<16x1xf32>
    %145 = arith.addf %144, %139 : vector<16x1xf32>
    %146 = arith.addf %145, %141 : vector<16x1xf32>
    %147 = arith.addf %146, %143 : vector<16x1xf32>
    %148 = tpu.reciprocal %147 {approx = true} : vector<16x1xf32> -> vector<16x1xf32>
    %149 = arith.mulf %135, %148 : vector<16x1xf32>
    %150 = vector.broadcast %149 : vector<16x1xf32> to vector<16x32xf32>
    %151 = arith.mulf %150, %9 : vector<16x32xf32>
    %152 = arith.mulf %137, %148 : vector<16x1xf32>
    %153 = vector.broadcast %152 : vector<16x1xf32> to vector<16x32xf32>
    %154 = arith.mulf %153, %17 : vector<16x32xf32>
    %155 = arith.addf %151, %154 : vector<16x32xf32>
    %156 = arith.mulf %139, %148 : vector<16x1xf32>
    %157 = vector.broadcast %156 : vector<16x1xf32> to vector<16x32xf32>
    %158 = arith.mulf %157, %25 : vector<16x32xf32>
    %159 = arith.addf %155, %158 : vector<16x32xf32>
    %160 = arith.mulf %141, %148 : vector<16x1xf32>
    %161 = vector.broadcast %160 : vector<16x1xf32> to vector<16x32xf32>
    %162 = arith.mulf %161, %33 : vector<16x32xf32>
    %163 = arith.addf %159, %162 : vector<16x32xf32>
    %164 = arith.mulf %143, %148 : vector<16x1xf32>
    %165 = vector.broadcast %164 : vector<16x1xf32> to vector<16x32xf32>
    %166 = arith.mulf %165, %41 : vector<16x32xf32>
    %167 = arith.addf %163, %166 : vector<16x32xf32>
    %168 = arith.addf %104, %167 : vector<16x32xf32>
    %169 = arith.mulf %23, %8 : vector<16x32xf32>
    %cst_38 = arith.constant dense<0.000000e+00> : vector<16xf32>
    %170 = vector.multi_reduction <add>, %169, %cst_38 [1] : vector<16x32xf32> to vector<16xf32>
    %171 = vector.shape_cast %170 : vector<16xf32> to vector<16x1xf32>
    %cst_39 = arith.constant 0.176776692 : f32
    %172 = vector.broadcast %cst_39 : f32 to vector<16x1xf32>
    %173 = arith.mulf %171, %172 : vector<16x1xf32>
    %174 = arith.mulf %23, %16 : vector<16x32xf32>
    %cst_40 = arith.constant dense<0.000000e+00> : vector<16xf32>
    %175 = vector.multi_reduction <add>, %174, %cst_40 [1] : vector<16x32xf32> to vector<16xf32>
    %176 = vector.shape_cast %175 : vector<16xf32> to vector<16x1xf32>
    %cst_41 = arith.constant 0.176776692 : f32
    %177 = vector.broadcast %cst_41 : f32 to vector<16x1xf32>
    %178 = arith.mulf %176, %177 : vector<16x1xf32>
    %179 = arith.mulf %23, %24 : vector<16x32xf32>
    %cst_42 = arith.constant dense<0.000000e+00> : vector<16xf32>
    %180 = vector.multi_reduction <add>, %179, %cst_42 [1] : vector<16x32xf32> to vector<16xf32>
    %181 = vector.shape_cast %180 : vector<16xf32> to vector<16x1xf32>
    %cst_43 = arith.constant 0.176776692 : f32
    %182 = vector.broadcast %cst_43 : f32 to vector<16x1xf32>
    %183 = arith.mulf %181, %182 : vector<16x1xf32>
    %184 = arith.mulf %23, %32 : vector<16x32xf32>
    %cst_44 = arith.constant dense<0.000000e+00> : vector<16xf32>
    %185 = vector.multi_reduction <add>, %184, %cst_44 [1] : vector<16x32xf32> to vector<16xf32>
    %186 = vector.shape_cast %185 : vector<16xf32> to vector<16x1xf32>
    %cst_45 = arith.constant 0.176776692 : f32
    %187 = vector.broadcast %cst_45 : f32 to vector<16x1xf32>
    %188 = arith.mulf %186, %187 : vector<16x1xf32>
    %189 = arith.mulf %23, %40 : vector<16x32xf32>
    %cst_46 = arith.constant dense<0.000000e+00> : vector<16xf32>
    %190 = vector.multi_reduction <add>, %189, %cst_46 [1] : vector<16x32xf32> to vector<16xf32>
    %191 = vector.shape_cast %190 : vector<16xf32> to vector<16x1xf32>
    %cst_47 = arith.constant 0.176776692 : f32
    %192 = vector.broadcast %cst_47 : f32 to vector<16x1xf32>
    %193 = arith.mulf %191, %192 : vector<16x1xf32>
    %194 = arith.maximumf %173, %178 : vector<16x1xf32>
    %195 = arith.maximumf %194, %183 : vector<16x1xf32>
    %196 = arith.maximumf %195, %188 : vector<16x1xf32>
    %197 = arith.maximumf %196, %193 : vector<16x1xf32>
    %198 = arith.subf %173, %197 : vector<16x1xf32>
    %199 = math.exp %198 : vector<16x1xf32>
    %200 = arith.subf %178, %197 : vector<16x1xf32>
    %201 = math.exp %200 : vector<16x1xf32>
    %202 = arith.subf %183, %197 : vector<16x1xf32>
    %203 = math.exp %202 : vector<16x1xf32>
    %204 = arith.subf %188, %197 : vector<16x1xf32>
    %205 = math.exp %204 : vector<16x1xf32>
    %206 = arith.subf %193, %197 : vector<16x1xf32>
    %207 = math.exp %206 : vector<16x1xf32>
    %208 = arith.addf %199, %201 : vector<16x1xf32>
    %209 = arith.addf %208, %203 : vector<16x1xf32>
    %210 = arith.addf %209, %205 : vector<16x1xf32>
    %211 = arith.addf %210, %207 : vector<16x1xf32>
    %212 = tpu.reciprocal %211 {approx = true} : vector<16x1xf32> -> vector<16x1xf32>
    %213 = arith.mulf %199, %212 : vector<16x1xf32>
    %214 = vector.broadcast %213 : vector<16x1xf32> to vector<16x32xf32>
    %215 = arith.mulf %214, %9 : vector<16x32xf32>
    %216 = arith.mulf %201, %212 : vector<16x1xf32>
    %217 = vector.broadcast %216 : vector<16x1xf32> to vector<16x32xf32>
    %218 = arith.mulf %217, %17 : vector<16x32xf32>
    %219 = arith.addf %215, %218 : vector<16x32xf32>
    %220 = arith.mulf %203, %212 : vector<16x1xf32>
    %221 = vector.broadcast %220 : vector<16x1xf32> to vector<16x32xf32>
    %222 = arith.mulf %221, %25 : vector<16x32xf32>
    %223 = arith.addf %219, %222 : vector<16x32xf32>
    %224 = arith.mulf %205, %212 : vector<16x1xf32>
    %225 = vector.broadcast %224 : vector<16x1xf32> to vector<16x32xf32>
    %226 = arith.mulf %225, %33 : vector<16x32xf32>
    %227 = arith.addf %223, %226 : vector<16x32xf32>
    %228 = arith.mulf %207, %212 : vector<16x1xf32>
    %229 = vector.broadcast %228 : vector<16x1xf32> to vector<16x32xf32>
    %230 = arith.mulf %229, %41 : vector<16x32xf32>
    %231 = arith.addf %227, %230 : vector<16x32xf32>
    %232 = arith.addf %168, %231 : vector<16x32xf32>
    %233 = arith.mulf %31, %8 : vector<16x32xf32>
    %cst_48 = arith.constant dense<0.000000e+00> : vector<16xf32>
    %234 = vector.multi_reduction <add>, %233, %cst_48 [1] : vector<16x32xf32> to vector<16xf32>
    %235 = vector.shape_cast %234 : vector<16xf32> to vector<16x1xf32>
    %cst_49 = arith.constant 0.176776692 : f32
    %236 = vector.broadcast %cst_49 : f32 to vector<16x1xf32>
    %237 = arith.mulf %235, %236 : vector<16x1xf32>
    %238 = arith.mulf %31, %16 : vector<16x32xf32>
    %cst_50 = arith.constant dense<0.000000e+00> : vector<16xf32>
    %239 = vector.multi_reduction <add>, %238, %cst_50 [1] : vector<16x32xf32> to vector<16xf32>
    %240 = vector.shape_cast %239 : vector<16xf32> to vector<16x1xf32>
    %cst_51 = arith.constant 0.176776692 : f32
    %241 = vector.broadcast %cst_51 : f32 to vector<16x1xf32>
    %242 = arith.mulf %240, %241 : vector<16x1xf32>
    %243 = arith.mulf %31, %24 : vector<16x32xf32>
    %cst_52 = arith.constant dense<0.000000e+00> : vector<16xf32>
    %244 = vector.multi_reduction <add>, %243, %cst_52 [1] : vector<16x32xf32> to vector<16xf32>
    %245 = vector.shape_cast %244 : vector<16xf32> to vector<16x1xf32>
    %cst_53 = arith.constant 0.176776692 : f32
    %246 = vector.broadcast %cst_53 : f32 to vector<16x1xf32>
    %247 = arith.mulf %245, %246 : vector<16x1xf32>
    %248 = arith.mulf %31, %32 : vector<16x32xf32>
    %cst_54 = arith.constant dense<0.000000e+00> : vector<16xf32>
    %249 = vector.multi_reduction <add>, %248, %cst_54 [1] : vector<16x32xf32> to vector<16xf32>
    %250 = vector.shape_cast %249 : vector<16xf32> to vector<16x1xf32>
    %cst_55 = arith.constant 0.176776692 : f32
    %251 = vector.broadcast %cst_55 : f32 to vector<16x1xf32>
    %252 = arith.mulf %250, %251 : vector<16x1xf32>
    %253 = arith.mulf %31, %40 : vector<16x32xf32>
    %cst_56 = arith.constant dense<0.000000e+00> : vector<16xf32>
    %254 = vector.multi_reduction <add>, %253, %cst_56 [1] : vector<16x32xf32> to vector<16xf32>
    %255 = vector.shape_cast %254 : vector<16xf32> to vector<16x1xf32>
    %cst_57 = arith.constant 0.176776692 : f32
    %256 = vector.broadcast %cst_57 : f32 to vector<16x1xf32>
    %257 = arith.mulf %255, %256 : vector<16x1xf32>
    %258 = arith.maximumf %237, %242 : vector<16x1xf32>
    %259 = arith.maximumf %258, %247 : vector<16x1xf32>
    %260 = arith.maximumf %259, %252 : vector<16x1xf32>
    %261 = arith.maximumf %260, %257 : vector<16x1xf32>
    %262 = arith.subf %237, %261 : vector<16x1xf32>
    %263 = math.exp %262 : vector<16x1xf32>
    %264 = arith.subf %242, %261 : vector<16x1xf32>
    %265 = math.exp %264 : vector<16x1xf32>
    %266 = arith.subf %247, %261 : vector<16x1xf32>
    %267 = math.exp %266 : vector<16x1xf32>
    %268 = arith.subf %252, %261 : vector<16x1xf32>
    %269 = math.exp %268 : vector<16x1xf32>
    %270 = arith.subf %257, %261 : vector<16x1xf32>
    %271 = math.exp %270 : vector<16x1xf32>
    %272 = arith.addf %263, %265 : vector<16x1xf32>
    %273 = arith.addf %272, %267 : vector<16x1xf32>
    %274 = arith.addf %273, %269 : vector<16x1xf32>
    %275 = arith.addf %274, %271 : vector<16x1xf32>
    %276 = tpu.reciprocal %275 {approx = true} : vector<16x1xf32> -> vector<16x1xf32>
    %277 = arith.mulf %263, %276 : vector<16x1xf32>
    %278 = vector.broadcast %277 : vector<16x1xf32> to vector<16x32xf32>
    %279 = arith.mulf %278, %9 : vector<16x32xf32>
    %280 = arith.mulf %265, %276 : vector<16x1xf32>
    %281 = vector.broadcast %280 : vector<16x1xf32> to vector<16x32xf32>
    %282 = arith.mulf %281, %17 : vector<16x32xf32>
    %283 = arith.addf %279, %282 : vector<16x32xf32>
    %284 = arith.mulf %267, %276 : vector<16x1xf32>
    %285 = vector.broadcast %284 : vector<16x1xf32> to vector<16x32xf32>
    %286 = arith.mulf %285, %25 : vector<16x32xf32>
    %287 = arith.addf %283, %286 : vector<16x32xf32>
    %288 = arith.mulf %269, %276 : vector<16x1xf32>
    %289 = vector.broadcast %288 : vector<16x1xf32> to vector<16x32xf32>
    %290 = arith.mulf %289, %33 : vector<16x32xf32>
    %291 = arith.addf %287, %290 : vector<16x32xf32>
    %292 = arith.mulf %271, %276 : vector<16x1xf32>
    %293 = vector.broadcast %292 : vector<16x1xf32> to vector<16x32xf32>
    %294 = arith.mulf %293, %41 : vector<16x32xf32>
    %295 = arith.addf %291, %294 : vector<16x32xf32>
    %296 = arith.addf %232, %295 : vector<16x32xf32>
    %297 = arith.mulf %39, %8 : vector<16x32xf32>
    %cst_58 = arith.constant dense<0.000000e+00> : vector<16xf32>
    %298 = vector.multi_reduction <add>, %297, %cst_58 [1] : vector<16x32xf32> to vector<16xf32>
    %299 = vector.shape_cast %298 : vector<16xf32> to vector<16x1xf32>
    %cst_59 = arith.constant 0.176776692 : f32
    %300 = vector.broadcast %cst_59 : f32 to vector<16x1xf32>
    %301 = arith.mulf %299, %300 : vector<16x1xf32>
    %302 = arith.mulf %39, %16 : vector<16x32xf32>
    %cst_60 = arith.constant dense<0.000000e+00> : vector<16xf32>
    %303 = vector.multi_reduction <add>, %302, %cst_60 [1] : vector<16x32xf32> to vector<16xf32>
    %304 = vector.shape_cast %303 : vector<16xf32> to vector<16x1xf32>
    %cst_61 = arith.constant 0.176776692 : f32
    %305 = vector.broadcast %cst_61 : f32 to vector<16x1xf32>
    %306 = arith.mulf %304, %305 : vector<16x1xf32>
    %307 = arith.mulf %39, %24 : vector<16x32xf32>
    %cst_62 = arith.constant dense<0.000000e+00> : vector<16xf32>
    %308 = vector.multi_reduction <add>, %307, %cst_62 [1] : vector<16x32xf32> to vector<16xf32>
    %309 = vector.shape_cast %308 : vector<16xf32> to vector<16x1xf32>
    %cst_63 = arith.constant 0.176776692 : f32
    %310 = vector.broadcast %cst_63 : f32 to vector<16x1xf32>
    %311 = arith.mulf %309, %310 : vector<16x1xf32>
    %312 = arith.mulf %39, %32 : vector<16x32xf32>
    %cst_64 = arith.constant dense<0.000000e+00> : vector<16xf32>
    %313 = vector.multi_reduction <add>, %312, %cst_64 [1] : vector<16x32xf32> to vector<16xf32>
    %314 = vector.shape_cast %313 : vector<16xf32> to vector<16x1xf32>
    %cst_65 = arith.constant 0.176776692 : f32
    %315 = vector.broadcast %cst_65 : f32 to vector<16x1xf32>
    %316 = arith.mulf %314, %315 : vector<16x1xf32>
    %317 = arith.mulf %39, %40 : vector<16x32xf32>
    %cst_66 = arith.constant dense<0.000000e+00> : vector<16xf32>
    %318 = vector.multi_reduction <add>, %317, %cst_66 [1] : vector<16x32xf32> to vector<16xf32>
    %319 = vector.shape_cast %318 : vector<16xf32> to vector<16x1xf32>
    %cst_67 = arith.constant 0.176776692 : f32
    %320 = vector.broadcast %cst_67 : f32 to vector<16x1xf32>
    %321 = arith.mulf %319, %320 : vector<16x1xf32>
    %322 = arith.maximumf %301, %306 : vector<16x1xf32>
    %323 = arith.maximumf %322, %311 : vector<16x1xf32>
    %324 = arith.maximumf %323, %316 : vector<16x1xf32>
    %325 = arith.maximumf %324, %321 : vector<16x1xf32>
    %326 = arith.subf %301, %325 : vector<16x1xf32>
    %327 = math.exp %326 : vector<16x1xf32>
    %328 = arith.subf %306, %325 : vector<16x1xf32>
    %329 = math.exp %328 : vector<16x1xf32>
    %330 = arith.subf %311, %325 : vector<16x1xf32>
    %331 = math.exp %330 : vector<16x1xf32>
    %332 = arith.subf %316, %325 : vector<16x1xf32>
    %333 = math.exp %332 : vector<16x1xf32>
    %334 = arith.subf %321, %325 : vector<16x1xf32>
    %335 = math.exp %334 : vector<16x1xf32>
    %336 = arith.addf %327, %329 : vector<16x1xf32>
    %337 = arith.addf %336, %331 : vector<16x1xf32>
    %338 = arith.addf %337, %333 : vector<16x1xf32>
    %339 = arith.addf %338, %335 : vector<16x1xf32>
    %340 = tpu.reciprocal %339 {approx = true} : vector<16x1xf32> -> vector<16x1xf32>
    %341 = arith.mulf %327, %340 : vector<16x1xf32>
    %342 = vector.broadcast %341 : vector<16x1xf32> to vector<16x32xf32>
    %343 = arith.mulf %342, %9 : vector<16x32xf32>
    %344 = arith.mulf %329, %340 : vector<16x1xf32>
    %345 = vector.broadcast %344 : vector<16x1xf32> to vector<16x32xf32>
    %346 = arith.mulf %345, %17 : vector<16x32xf32>
    %347 = arith.addf %343, %346 : vector<16x32xf32>
    %348 = arith.mulf %331, %340 : vector<16x1xf32>
    %349 = vector.broadcast %348 : vector<16x1xf32> to vector<16x32xf32>
    %350 = arith.mulf %349, %25 : vector<16x32xf32>
    %351 = arith.addf %347, %350 : vector<16x32xf32>
    %352 = arith.mulf %333, %340 : vector<16x1xf32>
    %353 = vector.broadcast %352 : vector<16x1xf32> to vector<16x32xf32>
    %354 = arith.mulf %353, %33 : vector<16x32xf32>
    %355 = arith.addf %351, %354 : vector<16x32xf32>
    %356 = arith.mulf %335, %340 : vector<16x1xf32>
    %357 = vector.broadcast %356 : vector<16x1xf32> to vector<16x32xf32>
    %358 = arith.mulf %357, %41 : vector<16x32xf32>
    %359 = arith.addf %355, %358 : vector<16x32xf32>
    %360 = arith.addf %296, %359 : vector<16x32xf32>
    %cst_68 = arith.constant 2.000000e-01 : f32
    %361 = vector.broadcast %cst_68 : f32 to vector<16x32xf32>
    %362 = arith.mulf %360, %361 : vector<16x32xf32>
    %c0_69 = arith.constant 0 : index
    %c0_70 = arith.constant 0 : index
    %363 = vector.load %arg4[%c0_69, %c0_70] : memref<32x32xf32, #tpu.memory_space<vmem>>, vector<32x32xf32>
    %cst_71 = arith.constant dense<0.000000e+00> : vector<16x32xf32>
    %364 = tpu.matmul %362, %363, %cst_71 {dimension_numbers = #tpu.dot_dimension_numbers<[1], [0], [0], [1], [0, 0, 1, 1], [], []>} : vector<16x32xf32>, vector<32x32xf32>, vector<16x32xf32> -> vector<16x32xf32>
    %c0_72 = arith.constant 0 : index
    %c0_73 = arith.constant 0 : index
    %365 = vector.load %arg5[%c0_72, %c0_73] : memref<1x32xf32, #tpu.memory_space<vmem>>, vector<1x32xf32>
    %366 = vector.broadcast %365 : vector<1x32xf32> to vector<16x32xf32>
    %367 = arith.addf %364, %366 : vector<16x32xf32>
    %c0_74 = arith.constant 0 : index
    %c0_75 = arith.constant 0 : index
    %368 = vector.load %arg6[%c0_74, %c0_75] : memref<16x32xf32, #tpu.memory_space<vmem>>, vector<16x32xf32>
    tpu.vector_store %arg6[%c0_74, %c0_75], %367 {strides = array<i32>} : memref<16x32xf32, #tpu.memory_space<vmem>>, vector<16x32xf32>,
    return
  }
  func.func @transform_0(%arg0: i32) -> (i32, i32, i32) {
    %c0_i32 = arith.constant 0 : i32
    %c0_i32_0 = arith.constant 0 : i32
    %c0_i32_1 = arith.constant 0 : i32
    return %c0_i32, %arg0, %c0_i32_0 : i32, i32, i32
  }
  func.func @transform_1(%arg0: i32) -> (i32, i32) {
    %c0_i32 = arith.constant 0 : i32
    %c0_i32_0 = arith.constant 0 : i32
    %c0_i32_1 = arith.constant 0 : i32
    return %c0_i32, %c0_i32_0 : i32, i32
  }
  func.func @transform_2(%arg0: i32) -> (i32, i32) {
    %c0_i32 = arith.constant 0 : i32
    %c0_i32_0 = arith.constant 0 : i32
    %c0_i32_1 = arith.constant 0 : i32
    return %c0_i32, %c0_i32_0 : i32, i32
  }
  func.func @transform_3(%arg0: i32) -> (i32, i32) {
    %c0_i32 = arith.constant 0 : i32
    %c0_i32_0 = arith.constant 0 : i32
    %c0_i32_1 = arith.constant 0 : i32
    return %c0_i32, %c0_i32_0 : i32, i32
  }
  func.func @transform_4(%arg0: i32) -> (i32, i32) {
    %c0_i32 = arith.constant 0 : i32
    %c0_i32_0 = arith.constant 0 : i32
    %c0_i32_1 = arith.constant 0 : i32
    return %c0_i32, %c0_i32_0 : i32, i32
  }
  func.func @transform_5(%arg0: i32) -> (i32, i32) {
    %c0_i32 = arith.constant 0 : i32
    %c0_i32_0 = arith.constant 0 : i32
    return %arg0, %c0_i32 : i32, i32
  }
}

</mosaic_0001>

<llo_original>
// kernel: tpu_custom_call.1
$region0: #{tpu_custom_call.1}
  #allocation0 [shape = 'u32[]', space=smem, size = 0x4, offset = 0x4, fixed_abs, tag = 'smem constant byte address 0x4 - core index']
  #allocation1 [shape = 'u32[144,128]{1,0:T(1,128)}', space=vmem, size = 0x12000, scoped, tag = 'internal scratch']
  #allocation9 [shape = 's32[]', space=sflag, size = 0x4, offset = 0, fixed_abs, tag = 'sflag constant byte address 0x0 - dummy sync flag']
  %s0 = inlined_call_operand.hbm [shape: f32[5,32,32], index: 0, kind: input, shape index: {}]
  %s1 = inlined_call_operand.hbm [shape: f32[32,96], index: 1, kind: input, shape index: {}]
  %s2 = inlined_call_operand.vmem [shape: f32[1,96], index: 2, kind: input, shape index: {}]
  %s3 = inlined_call_operand.hbm [shape: f32[32,32], index: 3, kind: input, shape index: {}]
  %s4 = inlined_call_operand.vmem [shape: f32[1,32], index: 4, kind: input, shape index: {}]
  %s5 = inlined_call_operand.hbm [shape: f32[32,32], index: 5, kind: output, shape index: {}]
  %s6 = sld [smem:[#allocation0]]
  $region65: #{tpu_custom_call.1} parent=0
    _
  %s8 = ssub.s32 1, %s6
  %s9 = scalar_select 0, %s8, %s6
  $region1: #{tpu_custom_call.1} parent=0
    #allocation2 [shape = 'u8[81920]{0}', space=vmem, size = 0x14000, scoped, tag = 'input window, operand 0']
    #allocation3 [shape = 's32[2]{0}', space=sflag, size = 0x8, scoped, tag = 'scoped memory for tpu_custom_call.1']
    #allocation4 [shape = 's32[2]{0}', space=sflag, size = 0x8, scoped, tag = 'scoped memory for tpu_custom_call.1']
    #allocation5 [shape = 'u8[16384]{0}', space=vmem, size = 0x4000, scoped, tag = 'input window, operand 1, single buffered']
    #allocation6 [shape = 's32[1]{0}', space=sflag, size = 0x4, scoped, tag = 'scoped memory for tpu_custom_call.1']
    #allocation7 [shape = 'u8[16384]{0}', space=vmem, size = 0x4000, scoped, tag = 'input window, operand 3, single buffered']
    #allocation8 [shape = 'u8[16384]{0}', space=vmem, size = 0x4000, scoped, tag = 'output window, operand 0']
    %10 = vsyncpa [#allocation3], 0
    %s11 = scalar_lea.sflag [#allocation3], 1
    %12 = vsyncpa %s11, 0
    %13 = vsyncpa [#allocation6], 0
    %14 = vsyncpa [#allocation4], 0
    %s15 = scalar_lea.sflag [#allocation4], 1
    %16 = vsyncpa %s15, 0
    loop: start=0, step=1, limit=4
    $region2: #{tpu_custom_call.1} parent=1 // loop_pre_header
      _
    $region3: #{tpu_custom_call.1} parent=1 // loop_header
      %s18 = sphi 0, %s22
      %p19 = scmp.ge.s32.totalorder %s18, 4
      %s28 = sphi 0, %s30
      %s31 = sphi 0, %s28
      %s32 = sphi 0, %s31
      %s48 = sphi 0, %s32
      %s52 = sphi 0, %s52
      %s54 = sphi 0, %s52
      %s55 = sphi 0, %s54
      %s69 = sphi 0, %s55
      %s73 = sphi 0, %s73
      %s75 = sphi 0, %s73
      %s76 = sphi 0, %s75
      %s90 = sphi 0, %s76
      %s94 = sphi 0, %s94
      %s96 = sphi 0, %s94
      %s97 = sphi 0, %s96
      %s111 = sphi 0, %s97
      %s115 = sphi 0, %s115
      %s117 = sphi 0, %s115
      %s118 = sphi 0, %s117
      %s132 = sphi 0, %s118
      %s138 = sphi 0, %s140
      %s141 = sphi 0, %s138
      %s142 = sphi 0, %s141
      %s158 = sphi 0, %s142
    $region4: #{tpu_custom_call.1} parent=1 // loop_header_branch
      %21 = sbr.rel (%p19) target = $region8
    $region5: #{tpu_custom_call.1} parent=1 // loop_body
      %s23 = ssub.s32 %s18, 1
      %s24 = ssub.s32 %s18, 2
      %s25 = sadd.s32 %s18, 1
      %s26 = ssub.s32 %s18, %s25
      %p27 = scmp.eq.s32.totalorder %s26, 0
      %s29 = sadd.s32 %s28, 1
      %s30 = scalar_select %p27, %s28, %s29
      %p33 = pneg %p27
      %p34 = scmp.eq.s32.totalorder %s18, 1
      %p35 = por %p33, %p34
      %p36 = scmp.ne.s32.totalorder %s28, %s31
      %p37 = scmp.eq.s32.totalorder %s18, 0
      %p38 = por %p36, %p37
      %p39 = scmp.ne.s32.totalorder %s28, %s31
      %p40 = scmp.eq.s32.totalorder %s23, 1
      %p41 = por %p39, %p40
      %p42 = scmp.ne.s32.totalorder %s31, %s32
      %p43 = scmp.eq.s32.totalorder %s23, 0
      %p44 = por %p42, %p43
      %p45 = scmp.ne.s32.totalorder %s31, %s32
      %p46 = scmp.eq.s32.totalorder %s24, 1
      %p47 = por %p45, %p46
      %p49 = scmp.ne.s32.totalorder %s32, %s48
      %p50 = scmp.eq.s32.totalorder %s24, 0
      %p51 = por %p49, %p50
      %s53 = sadd.s32 %s52, 1
      %p56 = scmp.eq.s32.totalorder %s18, 1
      %p57 = scmp.ne.s32.totalorder %s52, %s54
      %p58 = scmp.eq.s32.totalorder %s18, 0
      %p59 = por %p57, %p58
      %p60 = scmp.ne.s32.totalorder %s52, %s54
      %p61 = scmp.eq.s32.totalorder %s23, 1
      %p62 = por %p60, %p61
      %p63 = scmp.ne.s32.totalorder %s54, %s55
      %p64 = scmp.eq.s32.totalorder %s23, 0
      %p65 = por %p63, %p64
      %p66 = scmp.ne.s32.totalorder %s54, %s55
      %p67 = scmp.eq.s32.totalorder %s24, 1
      %p68 = por %p66, %p67
      %p70 = scmp.ne.s32.totalorder %s55, %s69
      %p71 = scmp.eq.s32.totalorder %s24, 0
      %p72 = por %p70, %p71
      %s74 = sadd.s32 %s73, 1
      %p77 = scmp.eq.s32.totalorder %s18, 1
      %p78 = scmp.ne.s32.totalorder %s73, %s75
      %p79 = scmp.eq.s32.totalorder %s18, 0
      %p80 = por %p78, %p79
      %p81 = scmp.ne.s32.totalorder %s73, %s75
      %p82 = scmp.eq.s32.totalorder %s23, 1
      %p83 = por %p81, %p82
      %p84 = scmp.ne.s32.totalorder %s75, %s76
      %p85 = scmp.eq.s32.totalorder %s23, 0
      %p86 = por %p84, %p85
      %p87 = scmp.ne.s32.totalorder %s75, %s76
      %p88 = scmp.eq.s32.totalorder %s24, 1
      %p89 = por %p87, %p88
      %p91 = scmp.ne.s32.totalorder %s76, %s90
      %p92 = scmp.eq.s32.totalorder %s24, 0
      %p93 = por %p91, %p92
      %s95 = sadd.s32 %s94, 1
      %p98 = scmp.eq.s32.totalorder %s18, 1
      %p99 = scmp.ne.s32.totalorder %s94, %s96
      %p100 = scmp.eq.s32.totalorder %s18, 0
      %p101 = por %p99, %p100
      %p102 = scmp.ne.s32.totalorder %s94, %s96
      %p103 = scmp.eq.s32.totalorder %s23, 1
      %p104 = por %p102, %p103
      %p105 = scmp.ne.s32.totalorder %s96, %s97
      %p106 = scmp.eq.s32.totalorder %s23, 0
      %p107 = por %p105, %p106
      %p108 = scmp.ne.s32.totalorder %s96, %s97
      %p109 = scmp.eq.s32.totalorder %s24, 1
      %p110 = por %p108, %p109
      %p112 = scmp.ne.s32.totalorder %s97, %s111
      %p113 = scmp.eq.s32.totalorder %s24, 0
      %p114 = por %p112, %p113
      %s116 = sadd.s32 %s115, 1
      %p119 = scmp.eq.s32.totalorder %s18, 1
      %p120 = scmp.ne.s32.totalorder %s115, %s117
      %p121 = scmp.eq.s32.totalorder %s18, 0
      %p122 = por %p120, %p121
      %p123 = scmp.ne.s32.totalorder %s115, %s117
      %p124 = scmp.eq.s32.totalorder %s23, 1
      %p125 = por %p123, %p124
      %p126 = scmp.ne.s32.totalorder %s117, %s118
      %p127 = scmp.eq.s32.totalorder %s23, 0
      %p128 = por %p126, %p127
      %p129 = scmp.ne.s32.totalorder %s117, %s118
      %p130 = scmp.eq.s32.totalorder %s24, 1
      %p131 = por %p129, %p130
      %p133 = scmp.ne.s32.totalorder %s118, %s132
      %p134 = scmp.eq.s32.totalorder %s24, 0
      %p135 = por %p133, %p134
      %s136 = ssub.s32 %s18, %s25
      %p137 = scmp.eq.s32.totalorder %s136, 0
      %s139 = sadd.s32 %s138, 1
      %s140 = scalar_select %p137, %s138, %s139
      %p143 = pneg %p137
      %p144 = scmp.eq.s32.totalorder %s18, 1
      %p145 = por %p143, %p144
      %p146 = scmp.ne.s32.totalorder %s138, %s141
      %p147 = scmp.eq.s32.totalorder %s18, 0
      %p148 = por %p146, %p147
      %p149 = scmp.ne.s32.totalorder %s138, %s141
      %p150 = scmp.eq.s32.totalorder %s23, 1
      %p151 = por %p149, %p150
      %p152 = scmp.ne.s32.totalorder %s141, %s142
      %p153 = scmp.eq.s32.totalorder %s23, 0
      %p154 = por %p152, %p153
      %p155 = scmp.ne.s32.totalorder %s141, %s142
      %p156 = scmp.eq.s32.totalorder %s24, 1
      %p157 = por %p155, %p156
      %p159 = scmp.ne.s32.totalorder %s142, %s158
      %p160 = scmp.eq.s32.totalorder %s24, 0
      %p161 = por %p159, %p160
      %p162 = scmp.le.s32.totalorder 1, %s18
      %p163 = scmp.lt.s32.totalorder %s18, 3
      %p164 = pnand %p162, %p163
      %p165 = pneg %p164
      // Predicated region
      $region9: #{tpu_custom_call.1} parent=5 // pred_check
        _
      $region10: #{tpu_custom_call.1} parent=5 // pred_check_branch
        %167 = sbr.rel (%p164) target = $region12
      $region11: #{tpu_custom_call.1} parent=5 // pred_region
        %s168 = ssub.s32 %s18, 1
        // Predicated region
        $region13: #{tpu_custom_call.1} parent=11 // pred_check
          %p169 = pneg %p65
        $region14: #{tpu_custom_call.1} parent=11 // pred_check_branch
          %171 = sbr.rel (%p169) target = $region16
        $region15: #{tpu_custom_call.1} parent=11 // pred_region
          %s173 = ssub.s32 512, 512
          %174 = vsyncadd [#allocation6], %s173
          %s175 = sshll.u32 [#allocation5], 4
          %s176 = int_to_ptr.vmem [resolvable:$true] %s175
          %181 = dma.hbm_to_vmem [thread:$0]  %s1, 512, %s176, [#allocation6], 128, 128, 8
        $region16: #{tpu_custom_call.1} parent=11 // pred_fallthru
          _
        // Predicated region
        $region17: #{tpu_custom_call.1} parent=11 // pred_check
          %p182 = pneg %p86
        $region18: #{tpu_custom_call.1} parent=11 // pred_check_branch
          %184 = sbr.rel (%p182) target = $region20
        $region19: #{tpu_custom_call.1} parent=11 // pred_region
          _
        $region20: #{tpu_custom_call.1} parent=11 // pred_fallthru
          _
        // Predicated region
        $region21: #{tpu_custom_call.1} parent=11 // pred_check
          %p185 = pneg %p107
        $region22: #{tpu_custom_call.1} parent=11 // pred_check_branch
          %187 = sbr.rel (%p185) target = $region24
        $region23: #{tpu_custom_call.1} parent=11 // pred_region
          %s189 = ssub.s32 512, 512
          %190 = vsyncadd [#allocation6], %s189
          %s191 = sshll.u32 [#allocation7], 4
          %s192 = int_to_ptr.vmem [resolvable:$true] %s191
          %197 = dma.hbm_to_vmem [thread:$0]  %s3, 512, %s192, [#allocation6], 128, 128, 8
        $region24: #{tpu_custom_call.1} parent=11 // pred_fallthru
          _
        // Predicated region
        $region25: #{tpu_custom_call.1} parent=11 // pred_check
          %p198 = pneg %p128
        $region26: #{tpu_custom_call.1} parent=11 // pred_check_branch
          %200 = sbr.rel (%p198) target = $region28
        $region27: #{tpu_custom_call.1} parent=11 // pred_region
          _
        $region28: #{tpu_custom_call.1} parent=11 // pred_fallthru
          _
      $region12: #{tpu_custom_call.1} parent=5 // pred_fallthru
        _
      %p201 = scmp.lt.s32.totalorder %s18, 2
      // Predicated region
      $region29: #{tpu_custom_call.1} parent=5 // pred_check
        %p202 = pneg %p201
      $region30: #{tpu_custom_call.1} parent=5 // pred_check_branch
        %204 = sbr.rel (%p202) target = $region32
      $region31: #{tpu_custom_call.1} parent=5 // pred_region
        // Predicated region
        $region33: #{tpu_custom_call.1} parent=31 // pred_check
          %p205 = pneg %p38
        $region34: #{tpu_custom_call.1} parent=31 // pred_check_branch
          %207 = sbr.rel (%p205) target = $region36
        $region35: #{tpu_custom_call.1} parent=31 // pred_region
          #allocation10 [shape = 'u32[6]{0}', space=smem, size = 0x18, scoped, tag = 'DMA stride descriptor']
          %s208 = sand.u32 %s28, 1
          %s209 = scalar_lea.sflag [#allocation3], %s208
          %s210 = sand.u32 %s28, 1
          %s211 = smul.addr %s210, 80
          %s212 = scalar_lea.vmem [#allocation2], %s211
          %s213 = smul.u32 2, %s18
          %s215 = ssub.s32 1280, 1280
          %216 = vsyncadd %s209, %s215
          %s217 = smul.addr %s213, 128
          %s218 = scalar_lea.hbm %s0, %s217
          %s220 = sshll.u32 1, 14
          %s221 = sxor.u32 4294967295, %s220
          %s223 = sld [smem:[#allocation0]]
          %s224 = sadd.s32 2, %s223
          %s226 = sshll.u32 7, 26
          %s227 = sxor.u32 4294967295, %s226
          %s228 = sand.u32 0, %s227
          %s229 = sshll.u32 %s224, 26
          %s230 = sor.u32 %s228, %s229
          %s231 = sshll.u32 %s212, 4
          %s232 = int_to_ptr.vmem [resolvable:$true] %s231
          %238 = sst [smem:[#allocation10]] 512
          %s239 = scalar_lea.smem [#allocation10], 1
          %240 = sst [smem:[%s239]] 256
          %s241 = scalar_lea.smem [#allocation10], 2
          %242 = sst [smem:[%s241]] 2
          %s243 = scalar_lea.smem [#allocation10], 3
          %244 = sst [smem:[%s243]] 128
          %s245 = scalar_lea.smem [#allocation10], 4
          %246 = sst [smem:[%s245]] 128
          %s247 = scalar_lea.smem [#allocation10], 5
          %248 = sst [smem:[%s247]] 8
          %250 = dma.general %s218, 1280, %s232, %s209, [#allocation9], [#allocation10], %s230, 0
        $region36: #{tpu_custom_call.1} parent=31 // pred_fallthru
          _
      $region32: #{tpu_custom_call.1} parent=5 // pred_fallthru
        _
      %p251 = scmp.le.s32.totalorder 1, %s18
      %p252 = scmp.lt.s32.totalorder %s18, 3
      %p253 = pnand %p251, %p252
      %p254 = pneg %p253
      // Predicated region
      $region37: #{tpu_custom_call.1} parent=5 // pred_check
        _
      $region38: #{tpu_custom_call.1} parent=5 // pred_check_branch
        %256 = sbr.rel (%p253) target = $region40
      $region39: #{tpu_custom_call.1} parent=5 // pred_region
        %s257 = ssub.s32 %s18, 1
        %s258 = sand.u32 %s31, 1
        %s259 = scalar_lea.sflag [#allocation3], %s258
        %s260 = sand.u32 %s31, 1
        %s261 = smul.addr %s260, 80
        %s262 = scalar_lea.vmem [#allocation2], %s261
        // Predicated region
        $region41: #{tpu_custom_call.1} parent=39 // pred_check
          %p263 = pneg %p44
        $region42: #{tpu_custom_call.1} parent=39 // pred_check_branch
          %265 = sbr.rel (%p263) target = $region44
        $region43: #{tpu_custom_call.1} parent=39 // pred_region
          %266 = dma.done %s259, 1280
        $region44: #{tpu_custom_call.1} parent=39 // pred_fallthru
          _
        // Predicated region
        $region45: #{tpu_custom_call.1} parent=39 // pred_check
          %p267 = pneg %p65
        $region46: #{tpu_custom_call.1} parent=39 // pred_check_branch
          %269 = sbr.rel (%p267) target = $region48
        $region47: #{tpu_custom_call.1} parent=39 // pred_region
          %270 = dma.done [#allocation6], 512
        $region48: #{tpu_custom_call.1} parent=39 // pred_fallthru
          _
        // Predicated region
        $region49: #{tpu_custom_call.1} parent=39 // pred_check
          %p271 = pneg %p107
        $region50: #{tpu_custom_call.1} parent=39 // pred_check_branch
          %273 = sbr.rel (%p271) target = $region52
        $region51: #{tpu_custom_call.1} parent=39 // pred_region
          %274 = dma.done [#allocation6], 512
        $region52: #{tpu_custom_call.1} parent=39 // pred_fallthru
          _
        %s275 = sand.u32 %s31, 1
        %s276 = scalar_lea.sflag [#allocation3], %s275
        %s277 = sand.u32 %s31, 1
        %s278 = smul.addr %s277, 80
        %s279 = scalar_lea.vmem [#allocation2], %s278
        %p280 = pneg %p44
        %p281 = pneg %p41
        %p282 = pneg %p65
        %p283 = pneg %p62
        %p284 = pneg %p86
        %p285 = pneg %p83
        %p286 = pneg %p107
        %p287 = pneg %p104
        %p288 = pneg %p128
        %p289 = pneg %p125
        %p290 = pneg %p154
        %p291 = pneg %p151
        %s292 = sand.u32 %s141, 1
        %s293 = scalar_lea.sflag [#allocation4], %s292
        %s294 = sand.u32 %s141, 1
        %s295 = smul.addr %s294, 16
        %s296 = scalar_lea.vmem [#allocation8], %s295
        %s297 = smul.u32 2, %s23
        %s298 = smul.u32 2, %s23
        %v299 = vld [vmem:[#allocation5] sm:$0xff]
        %v300 = vld [vmem:[#allocation5 + $0x8] sm:$0xff]
        %v301 = vld [vmem:[#allocation5 + $0x10] sm:$0xff]
        %v302 = vld [vmem:[#allocation5 + $0x18] sm:$0xff]
        %v303 = vld [vmem:[%s2] sm:$0x1]
        %v304 = vld [vmem:[%s262] sm:$0xff]
        %v305 = vld [vmem:[%s262 + $0x8] sm:$0xff]
        %v307 = vlaneseq
        %v308 = vshrl.u32 %v307, 7
        %v309 = vsub.s32 0, %v308
        %v310 = vrot.slane %v303, %v309
        %vm312 = vcmask 261120
        %v314 = vsel %vm312, %v304, 0
        %v317 = vsel %vm312, %v305, 0
        %319 = vmatprep.subr.mxu0 0.0
        %320 = vmatpush1.msra.mxu0 %v299
        %321 = vmatprep.subr.mxu0 0.0
        %322 = vmatpush1.msra.mxu0 %v300
        %323 = vmatprep.subr.mxu0 0.0
        %324 = vmatpush1.msra.mxu0 %v301
        %325 = vmatprep.subr.mxu0 0.0
        %326 = vmatpush1.msra.mxu0 %v302
        %327 = vmatprep.subr.mxu0 0.0
        %328 = vmatpush1.msra.mxu0 0.0
        %329 = vmatprep.subr.mxu0 0.0
        %330 = vmatpush1.msra.mxu0 0.0
        %331 = vmatprep.subr.mxu0 0.0
        %332 = vmatpush1.msra.mxu0 0.0
        %333 = vmatprep.subr.mxu0 0.0
        %334 = vmatpush1.msra.mxu0 0.0
        %335 = vmatprep.subr.mxu0 0.0
        %336 = vmatpush1.msra.mxu0 0.0
        %337 = vmatprep.subr.mxu0 0.0
        %338 = vmatpush1.msra.mxu0 0.0
        %339 = vmatprep.subr.mxu0 0.0
        %340 = vmatpush1.msra.mxu0 0.0
        %341 = vmatprep.subr.mxu0 0.0
        %342 = vmatpush1.msra.mxu0 0.0
        %343 = vmatprep.subr.mxu0 0.0
        %344 = vmatpush1.msra.mxu0 0.0
        %345 = vmatprep.subr.mxu0 0.0
        %346 = vmatpush1.msra.mxu0 0.0
        %347 = vmatprep.subr.mxu0 0.0
        %348 = vmatpush1.msra.mxu0 0.0
        %349 = vmatprep.subr.mxu0 0.0
        %350 = vmatpush1.msra.mxu0 0.0
        %351 = vmatprep.subr.mxu0 0.0
        %352 = vmatpush1.msra.mxu0 0.0
        %353 = vmatprep.subr.mxu0 0.0
        %354 = vmatpush1.msra.mxu0 0.0
        %355 = vmatprep.subr.mxu0 0.0
        %356 = vmatpush1.msra.mxu0 0.0
        %357 = vmatprep.subr.mxu0 0.0
        %358 = vmatpush1.msra.mxu0 0.0
        %359 = vmatprep.subr.mxu0 0.0
        %360 = vmatpush1.msra.mxu0 0.0
        %361 = vmatprep.subr.mxu0 0.0
        %362 = vmatpush1.msra.mxu0 0.0
        %363 = vmatprep.subr.mxu0 0.0
        %364 = vmatpush1.msra.mxu0 0.0
        %365 = vmatprep.subr.mxu0 0.0
        %366 = vmatpush1.msra.mxu0 0.0
        %367 = vmatprep.subr.mxu0 0.0
        %368 = vmatpush1.msra.mxu0 0.0
        %369 = vmatprep.subr.mxu0 0.0
        %370 = vmatpush1.msra.mxu0 0.0
        %371 = vmatprep.subr.mxu0 0.0
        %372 = vmatpush1.msra.mxu0 0.0
        %373 = vmatprep.subr.mxu0 0.0
        %374 = vmatpush1.msra.mxu0 0.0
        %375 = vmatprep.subr.mxu0 0.0
        %376 = vmatpush1.msra.mxu0 0.0
        %377 = vmatprep.subr.mxu0 0.0
        %378 = vmatpush1.msra.mxu0 0.0
        %379 = vmatprep.subr.mxu0 0.0
        %380 = vmatpush1.msra.mxu0 0.0
        %381 = vmatprep.subr.mxu0 0.0
        %382 = vmatpush1.msra.mxu0 0.0
        %383 = vmatprep.mubr.f32.mxu0 0.0
        %384 = vmatmul.mubr.f32.gmra.mrb[0].mxu0 %v314
        %v385 = vpop.f32.mrb[0].mxu0
        %v386 = vadd.f32 %v310, %v385
        %v387 = vpop.f32.mrb[0].mxu0
        %388 = vmatprep.mubr.f32.mxu0 0.0
        %389 = vmatmul.mubr.f32.gmra.mrb[0].mxu0 %v317
        %v390 = vpop.f32.mrb[0].mxu0
        %v391 = vadd.f32 %v310, %v390
        %v392 = vpop.f32.mrb[0].mxu0
        %393 = vdwg.mxu0
        %s394 = scalar_lea.vmem %s262, 16 [#allocation2]
        %v395 = vld [vmem:[%s394] sm:$0xff]
        %v396 = vld [vmem:[%s394 + $0x8] sm:$0xff]
        %v398 = vsel %vm312, %v395, 0
        %v401 = vsel %vm312, %v396, 0
        %403 = vmatprep.subr.mxu0 0.0
        %404 = vmatpush1.msra.mxu0 %v299
        %405 = vmatprep.subr.mxu0 0.0
        %406 = vmatpush1.msra.mxu0 %v300
        %407 = vmatprep.subr.mxu0 0.0
        %408 = vmatpush1.msra.mxu0 %v301
        %409 = vmatprep.subr.mxu0 0.0
        %410 = vmatpush1.msra.mxu0 %v302
        %411 = vmatprep.subr.mxu0 0.0
        %412 = vmatpush1.msra.mxu0 0.0
        %413 = vmatprep.subr.mxu0 0.0
        %414 = vmatpush1.msra.mxu0 0.0
        %415 = vmatprep.subr.mxu0 0.0
        %416 = vmatpush1.msra.mxu0 0.0
        %417 = vmatprep.subr.mxu0 0.0
        %418 = vmatpush1.msra.mxu0 0.0
        %419 = vmatprep.subr.mxu0 0.0
        %420 = vmatpush1.msra.mxu0 0.0
        %421 = vmatprep.subr.mxu0 0.0
        %422 = vmatpush1.msra.mxu0 0.0
        %423 = vmatprep.subr.mxu0 0.0
        %424 = vmatpush1.msra.mxu0 0.0
        %425 = vmatprep.subr.mxu0 0.0
        %426 = vmatpush1.msra.mxu0 0.0
        %427 = vmatprep.subr.mxu0 0.0
        %428 = vmatpush1.msra.mxu0 0.0
        %429 = vmatprep.subr.mxu0 0.0
        %430 = vmatpush1.msra.mxu0 0.0
        %431 = vmatprep.subr.mxu0 0.0
        %432 = vmatpush1.msra.mxu0 0.0
        %433 = vmatprep.subr.mxu0 0.0
        %434 = vmatpush1.msra.mxu0 0.0
        %435 = vmatprep.subr.mxu0 0.0
        %436 = vmatpush1.msra.mxu0 0.0
        %437 = vmatprep.subr.mxu0 0.0
        %438 = vmatpush1.msra.mxu0 0.0
        %439 = vmatprep.subr.mxu0 0.0
        %440 = vmatpush1.msra.mxu0 0.0
        %441 = vmatprep.subr.mxu0 0.0
        %442 = vmatpush1.msra.mxu0 0.0
        %443 = vmatprep.subr.mxu0 0.0
        %444 = vmatpush1.msra.mxu0 0.0
        %445 = vmatprep.subr.mxu0 0.0
        %446 = vmatpush1.msra.mxu0 0.0
        %447 = vmatprep.subr.mxu0 0.0
        %448 = vmatpush1.msra.mxu0 0.0
        %449 = vmatprep.subr.mxu0 0.0
        %450 = vmatpush1.msra.mxu0 0.0
        %451 = vmatprep.subr.mxu0 0.0
        %452 = vmatpush1.msra.mxu0 0.0
        %453 = vmatprep.subr.mxu0 0.0
        %454 = vmatpush1.msra.mxu0 0.0
        %455 = vmatprep.subr.mxu0 0.0
        %456 = vmatpush1.msra.mxu0 0.0
        %457 = vmatprep.subr.mxu0 0.0
        %458 = vmatpush1.msra.mxu0 0.0
        %459 = vmatprep.subr.mxu0 0.0
        %460 = vmatpush1.msra.mxu0 0.0
        %461 = vmatprep.subr.mxu0 0.0
        %462 = vmatpush1.msra.mxu0 0.0
        %463 = vmatprep.subr.mxu0 0.0
        %464 = vmatpush1.msra.mxu0 0.0
        %465 = vmatprep.subr.mxu0 0.0
        %466 = vmatpush1.msra.mxu0 0.0
        %467 = vmatprep.mubr.f32.mxu0 0.0
        %468 = vmatmul.mubr.f32.gmra.mrb[0].mxu0 %v398
        %v469 = vpop.f32.mrb[0].mxu0
        %v470 = vadd.f32 %v310, %v469
        %v471 = vpop.f32.mrb[0].mxu0
        %472 = vmatprep.mubr.f32.mxu0 0.0
        %473 = vmatmul.mubr.f32.gmra.mrb[0].mxu0 %v401
        %v474 = vpop.f32.mrb[0].mxu0
        %v475 = vadd.f32 %v310, %v474
        %v476 = vpop.f32.mrb[0].mxu0
        %477 = vdwg.mxu0
        %s478 = scalar_lea.vmem %s262, 32 [#allocation2]
        %v479 = vld [vmem:[%s478] sm:$0xff]
        %v480 = vld [vmem:[%s478 + $0x8] sm:$0xff]
        %v482 = vsel %vm312, %v479, 0
        %v485 = vsel %vm312, %v480, 0
        %487 = vmatprep.subr.mxu0 0.0
        %488 = vmatpush1.msra.mxu0 %v299
        %489 = vmatprep.subr.mxu0 0.0
        %490 = vmatpush1.msra.mxu0 %v300
        %491 = vmatprep.subr.mxu0 0.0
        %492 = vmatpush1.msra.mxu0 %v301
        %493 = vmatprep.subr.mxu0 0.0
        %494 = vmatpush1.msra.mxu0 %v302
        %495 = vmatprep.subr.mxu0 0.0
        %496 = vmatpush1.msra.mxu0 0.0
        %497 = vmatprep.subr.mxu0 0.0
        %498 = vmatpush1.msra.mxu0 0.0
        %499 = vmatprep.subr.mxu0 0.0
        %500 = vmatpush1.msra.mxu0 0.0
        %501 = vmatprep.subr.mxu0 0.0
        %502 = vmatpush1.msra.mxu0 0.0
        %503 = vmatprep.subr.mxu0 0.0
        %504 = vmatpush1.msra.mxu0 0.0
        %505 = vmatprep.subr.mxu0 0.0
        %506 = vmatpush1.msra.mxu0 0.0
        %507 = vmatprep.subr.mxu0 0.0
        %508 = vmatpush1.msra.mxu0 0.0
        %509 = vmatprep.subr.mxu0 0.0
        %510 = vmatpush1.msra.mxu0 0.0
        %511 = vmatprep.subr.mxu0 0.0
        %512 = vmatpush1.msra.mxu0 0.0
        %513 = vmatprep.subr.mxu0 0.0
        %514 = vmatpush1.msra.mxu0 0.0
        %515 = vmatprep.subr.mxu0 0.0
        %516 = vmatpush1.msra.mxu0 0.0
        %517 = vmatprep.subr.mxu0 0.0
        %518 = vmatpush1.msra.mxu0 0.0
        %519 = vmatprep.subr.mxu0 0.0
        %520 = vmatpush1.msra.mxu0 0.0
        %521 = vmatprep.subr.mxu0 0.0
        %522 = vmatpush1.msra.mxu0 0.0
        %523 = vmatprep.subr.mxu0 0.0
        %524 = vmatpush1.msra.mxu0 0.0
        %525 = vmatprep.subr.mxu0 0.0
        %526 = vmatpush1.msra.mxu0 0.0
        %527 = vmatprep.subr.mxu0 0.0
        %528 = vmatpush1.msra.mxu0 0.0
        %529 = vmatprep.subr.mxu0 0.0
        %530 = vmatpush1.msra.mxu0 0.0
        %531 = vmatprep.subr.mxu0 0.0
        %532 = vmatpush1.msra.mxu0 0.0
        %533 = vmatprep.subr.mxu0 0.0
        %534 = vmatpush1.msra.mxu0 0.0
        %535 = vmatprep.subr.mxu0 0.0
        %536 = vmatpush1.msra.mxu0 0.0
        %537 = vmatprep.subr.mxu0 0.0
        %538 = vmatpush1.msra.mxu0 0.0
        %539 = vmatprep.subr.mxu0 0.0
        %540 = vmatpush1.msra.mxu0 0.0
        %541 = vmatprep.subr.mxu0 0.0
        %542 = vmatpush1.msra.mxu0 0.0
        %543 = vmatprep.subr.mxu0 0.0
        %544 = vmatpush1.msra.mxu0 0.0
        %545 = vmatprep.subr.mxu0 0.0
        %546 = vmatpush1.msra.mxu0 0.0
        %547 = vmatprep.subr.mxu0 0.0
        %548 = vmatpush1.msra.mxu0 0.0
        %549 = vmatprep.subr.mxu0 0.0
        %550 = vmatpush1.msra.mxu0 0.0
        %551 = vmatprep.mubr.f32.mxu0 0.0
        %552 = vmatmul.mubr.f32.gmra.mrb[0].mxu0 %v482
        %v553 = vpop.f32.mrb[0].mxu0
        %v554 = vadd.f32 %v310, %v553
        %v555 = vpop.f32.mrb[0].mxu0
        %556 = vmatprep.mubr.f32.mxu0 0.0
        %557 = vmatmul.mubr.f32.gmra.mrb[0].mxu0 %v485
        %v558 = vpop.f32.mrb[0].mxu0
        %v559 = vadd.f32 %v310, %v558
        %v560 = vpop.f32.mrb[0].mxu0
        %561 = vdwg.mxu0
        %s562 = scalar_lea.vmem %s262, 48 [#allocation2]
        %v563 = vld [vmem:[%s562] sm:$0xff]
        %v564 = vld [vmem:[%s562 + $0x8] sm:$0xff]
        %v566 = vsel %vm312, %v563, 0
        %v569 = vsel %vm312, %v564, 0
        %571 = vmatprep.subr.mxu0 0.0
        %572 = vmatpush1.msra.mxu0 %v299
        %573 = vmatprep.subr.mxu0 0.0
        %574 = vmatpush1.msra.mxu0 %v300
        %575 = vmatprep.subr.mxu0 0.0
        %576 = vmatpush1.msra.mxu0 %v301
        %577 = vmatprep.subr.mxu0 0.0
        %578 = vmatpush1.msra.mxu0 %v302
        %579 = vmatprep.subr.mxu0 0.0
        %580 = vmatpush1.msra.mxu0 0.0
        %581 = vmatprep.subr.mxu0 0.0
        %582 = vmatpush1.msra.mxu0 0.0
        %583 = vmatprep.subr.mxu0 0.0
        %584 = vmatpush1.msra.mxu0 0.0
        %585 = vmatprep.subr.mxu0 0.0
        %586 = vmatpush1.msra.mxu0 0.0
        %587 = vmatprep.subr.mxu0 0.0
        %588 = vmatpush1.msra.mxu0 0.0
        %589 = vmatprep.subr.mxu0 0.0
        %590 = vmatpush1.msra.mxu0 0.0
        %591 = vmatprep.subr.mxu0 0.0
        %592 = vmatpush1.msra.mxu0 0.0
        %593 = vmatprep.subr.mxu0 0.0
        %594 = vmatpush1.msra.mxu0 0.0
        %595 = vmatprep.subr.mxu0 0.0
        %596 = vmatpush1.msra.mxu0 0.0
        %597 = vmatprep.subr.mxu0 0.0
        %598 = vmatpush1.msra.mxu0 0.0
        %599 = vmatprep.subr.mxu0 0.0
        %600 = vmatpush1.msra.mxu0 0.0
        %601 = vmatprep.subr.mxu0 0.0
        %602 = vmatpush1.msra.mxu0 0.0
        %603 = vmatprep.subr.mxu0 0.0
        %604 = vmatpush1.msra.mxu0 0.0
        %605 = vmatprep.subr.mxu0 0.0
        %606 = vmatpush1.msra.mxu0 0.0
        %607 = vmatprep.subr.mxu0 0.0
        %608 = vmatpush1.msra.mxu0 0.0
        %609 = vmatprep.subr.mxu0 0.0
        %610 = vmatpush1.msra.mxu0 0.0
        %611 = vmatprep.subr.mxu0 0.0
        %612 = vmatpush1.msra.mxu0 0.0
        %613 = vmatprep.subr.mxu0 0.0
        %614 = vmatpush1.msra.mxu0 0.0
        %615 = vmatprep.subr.mxu0 0.0
        %616 = vmatpush1.msra.mxu0 0.0
        %617 = vmatprep.subr.mxu0 0.0
        %618 = vmatpush1.msra.mxu0 0.0
        %619 = vmatprep.subr.mxu0 0.0
        %620 = vmatpush1.msra.mxu0 0.0
        %621 = vmatprep.subr.mxu0 0.0
        %622 = vmatpush1.msra.mxu0 0.0
        %623 = vmatprep.subr.mxu0 0.0
        %624 = vmatpush1.msra.mxu0 0.0
        %625 = vmatprep.subr.mxu0 0.0
        %626 = vmatpush1.msra.mxu0 0.0
        %627 = vmatprep.subr.mxu0 0.0
        %628 = vmatpush1.msra.mxu0 0.0
        %629 = vmatprep.subr.mxu0 0.0
        %630 = vmatpush1.msra.mxu0 0.0
        %631 = vmatprep.subr.mxu0 0.0
        %632 = vmatpush1.msra.mxu0 0.0
        %633 = vmatprep.subr.mxu0 0.0
        %634 = vmatpush1.msra.mxu0 0.0
        %635 = vmatprep.mubr.f32.mxu0 0.0
        %636 = vmatmul.mubr.f32.gmra.mrb[0].mxu0 %v566
        %v637 = vpop.f32.mrb[0].mxu0
        %v638 = vadd.f32 %v310, %v637
        %v639 = vpop.f32.mrb[0].mxu0
        %640 = vmatprep.mubr.f32.mxu0 0.0
        %641 = vmatmul.mubr.f32.gmra.mrb[0].mxu0 %v569
        %v642 = vpop.f32.mrb[0].mxu0
        %v643 = vadd.f32 %v310, %v642
        %v644 = vpop.f32.mrb[0].mxu0
        %645 = vdwg.mxu0
        %s646 = scalar_lea.vmem %s262, 64 [#allocation2]
        %v647 = vld [vmem:[%s646] sm:$0xff]
        %v648 = vld [vmem:[%s646 + $0x8] sm:$0xff]
        %v650 = vsel %vm312, %v647, 0
        %v653 = vsel %vm312, %v648, 0
        %655 = vmatprep.subr.mxu0 0.0
        %656 = vmatpush1.msra.mxu0 %v299
        %657 = vmatprep.subr.mxu0 0.0
        %658 = vmatpush1.msra.mxu0 %v300
        %659 = vmatprep.subr.mxu0 0.0
        %660 = vmatpush1.msra.mxu0 %v301
        %661 = vmatprep.subr.mxu0 0.0
        %662 = vmatpush1.msra.mxu0 %v302
        %663 = vmatprep.subr.mxu0 0.0
        %664 = vmatpush1.msra.mxu0 0.0
        %665 = vmatprep.subr.mxu0 0.0
        %666 = vmatpush1.msra.mxu0 0.0
        %667 = vmatprep.subr.mxu0 0.0
        %668 = vmatpush1.msra.mxu0 0.0
        %669 = vmatprep.subr.mxu0 0.0
        %670 = vmatpush1.msra.mxu0 0.0
        %671 = vmatprep.subr.mxu0 0.0
        %672 = vmatpush1.msra.mxu0 0.0
        %673 = vmatprep.subr.mxu0 0.0
        %674 = vmatpush1.msra.mxu0 0.0
        %675 = vmatprep.subr.mxu0 0.0
        %676 = vmatpush1.msra.mxu0 0.0
        %677 = vmatprep.subr.mxu0 0.0
        %678 = vmatpush1.msra.mxu0 0.0
        %679 = vmatprep.subr.mxu0 0.0
        %680 = vmatpush1.msra.mxu0 0.0
        %681 = vmatprep.subr.mxu0 0.0
        %682 = vmatpush1.msra.mxu0 0.0
        %683 = vmatprep.subr.mxu0 0.0
        %684 = vmatpush1.msra.mxu0 0.0
        %685 = vmatprep.subr.mxu0 0.0
        %686 = vmatpush1.msra.mxu0 0.0
        %687 = vmatprep.subr.mxu0 0.0
        %688 = vmatpush1.msra.mxu0 0.0
        %689 = vmatprep.subr.mxu0 0.0
        %690 = vmatpush1.msra.mxu0 0.0
        %691 = vmatprep.subr.mxu0 0.0
        %692 = vmatpush1.msra.mxu0 0.0
        %693 = vmatprep.subr.mxu0 0.0
        %694 = vmatpush1.msra.mxu0 0.0
        %695 = vmatprep.subr.mxu0 0.0
        %696 = vmatpush1.msra.mxu0 0.0
        %697 = vmatprep.subr.mxu0 0.0
        %698 = vmatpush1.msra.mxu0 0.0
        %699 = vmatprep.subr.mxu0 0.0
        %700 = vmatpush1.msra.mxu0 0.0
        %701 = vmatprep.subr.mxu0 0.0
        %702 = vmatpush1.msra.mxu0 0.0
        %703 = vmatprep.subr.mxu0 0.0
        %704 = vmatpush1.msra.mxu0 0.0
        %705 = vmatprep.subr.mxu0 0.0
        %706 = vmatpush1.msra.mxu0 0.0
        %707 = vmatprep.subr.mxu0 0.0
        %708 = vmatpush1.msra.mxu0 0.0
        %709 = vmatprep.subr.mxu0 0.0
        %710 = vmatpush1.msra.mxu0 0.0
        %711 = vmatprep.subr.mxu0 0.0
        %712 = vmatpush1.msra.mxu0 0.0
        %713 = vmatprep.subr.mxu0 0.0
        %714 = vmatpush1.msra.mxu0 0.0
        %715 = vmatprep.subr.mxu0 0.0
        %716 = vmatpush1.msra.mxu0 0.0
        %717 = vmatprep.subr.mxu0 0.0
        %718 = vmatpush1.msra.mxu0 0.0
        %719 = vmatprep.mubr.f32.mxu0 0.0
        %720 = vmatmul.mubr.f32.gmra.mrb[0].mxu0 %v650
        %v721 = vpop.f32.mrb[0].mxu0
        %v722 = vadd.f32 %v310, %v721
        %v723 = vpop.f32.mrb[0].mxu0
        %724 = vmatprep.mubr.f32.mxu0 0.0
        %725 = vmatmul.mubr.f32.gmra.mrb[0].mxu0 %v653
        %v726 = vpop.f32.mrb[0].mxu0
        %v727 = vadd.f32 %v310, %v726
        %v728 = vpop.f32.mrb[0].mxu0
        %729 = vdwg.mxu0
        %732 = vrot.lane.b32.xlu0 %v386, 96
        %v733 = vpop.permute.xlu0 %732
        %734 = vrot.lane.b32.xlu0 %v391, 96
        %v735 = vpop.permute.xlu0 %734
        %v738 = vmul.f32 %v386, %v733
        %v739 = vmul.f32 %v391, %v735
        %v740 = vsel %vm312, %v738, 0.0
        %741 = vadd.xlane.f32.xlu0 %v740
        %v742 = vpop.xlane.xlu0 %741
        %v743 = vsel %vm312, %v739, 0.0
        %744 = vadd.xlane.f32.xlu0 %v743
        %v745 = vpop.xlane.xlu0 %744
        %v746 = vmul.f32 %v742, 0.17677669
        %v747 = vmul.f32 %v745, 0.17677669
        %750 = vrot.lane.b32.xlu0 %v470, 96
        %v751 = vpop.permute.xlu0 %750
        %752 = vrot.lane.b32.xlu0 %v475, 96
        %v753 = vpop.permute.xlu0 %752
        %v756 = vmul.f32 %v386, %v751
        %v757 = vmul.f32 %v391, %v753
        %v758 = vsel %vm312, %v756, 0.0
        %759 = vadd.xlane.f32.xlu0 %v758
        %v760 = vpop.xlane.xlu0 %759
        %v761 = vsel %vm312, %v757, 0.0
        %762 = vadd.xlane.f32.xlu0 %v761
        %v763 = vpop.xlane.xlu0 %762
        %v764 = vmul.f32 %v760, 0.17677669
        %v765 = vmul.f32 %v763, 0.17677669
        %768 = vrot.lane.b32.xlu0 %v554, 96
        %v769 = vpop.permute.xlu0 %768
        %770 = vrot.lane.b32.xlu0 %v559, 96
        %v771 = vpop.permute.xlu0 %770
        %v774 = vmul.f32 %v386, %v769
        %v775 = vmul.f32 %v391, %v771
        %v776 = vsel %vm312, %v774, 0.0
        %777 = vadd.xlane.f32.xlu0 %v776
        %v778 = vpop.xlane.xlu0 %777
        %v779 = vsel %vm312, %v775, 0.0
        %780 = vadd.xlane.f32.xlu0 %v779
        %v781 = vpop.xlane.xlu0 %780
        %v782 = vmul.f32 %v778, 0.17677669
        %v783 = vmul.f32 %v781, 0.17677669
        %786 = vrot.lane.b32.xlu0 %v638, 96
        %v787 = vpop.permute.xlu0 %786
        %788 = vrot.lane.b32.xlu0 %v643, 96
        %v789 = vpop.permute.xlu0 %788
        %v792 = vmul.f32 %v386, %v787
        %v793 = vmul.f32 %v391, %v789
        %v794 = vsel %vm312, %v792, 0.0
        %795 = vadd.xlane.f32.xlu0 %v794
        %v796 = vpop.xlane.xlu0 %795
        %v797 = vsel %vm312, %v793, 0.0
        %798 = vadd.xlane.f32.xlu0 %v797
        %v799 = vpop.xlane.xlu0 %798
        %v800 = vmul.f32 %v796, 0.17677669
        %v801 = vmul.f32 %v799, 0.17677669
        %804 = vrot.lane.b32.xlu0 %v722, 96
        %v805 = vpop.permute.xlu0 %804
        %806 = vrot.lane.b32.xlu0 %v727, 96
        %v807 = vpop.permute.xlu0 %806
        %v810 = vmul.f32 %v386, %v805
        %v811 = vmul.f32 %v391, %v807
        %v812 = vsel %vm312, %v810, 0.0
        %813 = vadd.xlane.f32.xlu0 %v812
        %v814 = vpop.xlane.xlu0 %813
        %v815 = vsel %vm312, %v811, 0.0
        %816 = vadd.xlane.f32.xlu0 %v815
        %v817 = vpop.xlane.xlu0 %816
        %v818 = vmul.f32 %v814, 0.17677669
        %v819 = vmul.f32 %v817, 0.17677669
        %v820 = vmax.f32 %v746, %v764
        %v821 = vmax.f32 %v747, %v765
        %v822 = vmax.f32 %v820, %v782
        %v823 = vmax.f32 %v821, %v783
        %v824 = vmax.f32 %v822, %v800
        %v825 = vmax.f32 %v823, %v801
        %v826 = vmax.f32 %v824, %v818
        %v827 = vmax.f32 %v825, %v819
        %v828 = vsub.f32 %v746, %v826
        %v829 = vsub.f32 %v747, %v827
        %v830 = vmul.f32 %v828, 1.442695
        %v831 = vpow.pop %v830
        %v832 = vmul.f32 %v829, 1.442695
        %v833 = vpow.pop %v832
        %v834 = vsub.f32 %v764, %v826
        %v835 = vsub.f32 %v765, %v827
        %v836 = vmul.f32 %v834, 1.442695
        %v837 = vpow.pop %v836
        %v838 = vmul.f32 %v835, 1.442695
        %v839 = vpow.pop %v838
        %v840 = vsub.f32 %v782, %v826
        %v841 = vsub.f32 %v783, %v827
        %v842 = vmul.f32 %v840, 1.442695
        %v843 = vpow.pop %v842
        %v844 = vmul.f32 %v841, 1.442695
        %v845 = vpow.pop %v844
        %v846 = vsub.f32 %v800, %v826
        %v847 = vsub.f32 %v801, %v827
        %v848 = vmul.f32 %v846, 1.442695
        %v849 = vpow.pop %v848
        %v850 = vmul.f32 %v847, 1.442695
        %v851 = vpow.pop %v850
        %v852 = vsub.f32 %v818, %v826
        %v853 = vsub.f32 %v819, %v827
        %v854 = vmul.f32 %v852, 1.442695
        %v855 = vpow.pop %v854
        %v856 = vmul.f32 %v853, 1.442695
        %v857 = vpow.pop %v856
        %v858 = vadd.f32 %v831, %v837
        %v859 = vadd.f32 %v833, %v839
        %v860 = vadd.f32 %v858, %v843
        %v861 = vadd.f32 %v859, %v845
        %v862 = vadd.f32 %v860, %v849
        %v863 = vadd.f32 %v861, %v851
        %v864 = vadd.f32 %v862, %v855
        %v865 = vadd.f32 %v863, %v857
        %v866 = vrcp.pop %v864
        %v867 = vrcp.pop %v865
        %v868 = vmul.f32 %v831, %v866
        %v869 = vmul.f32 %v833, %v867
        %v870 = vmul.f32 %v868, %v386
        %v871 = vmul.f32 %v869, %v391
        %v872 = vmul.f32 %v837, %v866
        %v873 = vmul.f32 %v839, %v867
        %v874 = vmul.f32 %v872, %v470
        %v875 = vmul.f32 %v873, %v475
        %v876 = vadd.f32 %v870, %v874
        %v877 = vadd.f32 %v871, %v875
        %v878 = vmul.f32 %v843, %v866
        %v879 = vmul.f32 %v845, %v867
        %v880 = vmul.f32 %v878, %v554
        %v881 = vmul.f32 %v879, %v559
        %v882 = vadd.f32 %v876, %v880
        %v883 = vadd.f32 %v877, %v881
        %v884 = vmul.f32 %v849, %v866
        %v885 = vmul.f32 %v851, %v867
        %v886 = vmul.f32 %v884, %v638
        %v887 = vmul.f32 %v885, %v643
        %v888 = vadd.f32 %v882, %v886
        %v889 = vadd.f32 %v883, %v887
        %v890 = vmul.f32 %v855, %v866
        %v891 = vmul.f32 %v857, %v867
        %v892 = vmul.f32 %v890, %v722
        %v893 = vmul.f32 %v891, %v727
        %v894 = vadd.f32 %v888, %v892
        %v895 = vadd.f32 %v889, %v893
        %v896 = vmul.f32 %v470, %v733
        %v897 = vmul.f32 %v475, %v735
        %v898 = vsel %vm312, %v896, 0.0
        %899 = vadd.xlane.f32.xlu0 %v898
        %v900 = vpop.xlane.xlu0 %899
        %v901 = vsel %vm312, %v897, 0.0
        %902 = vadd.xlane.f32.xlu0 %v901
        %v903 = vpop.xlane.xlu0 %902
        %v904 = vmul.f32 %v900, 0.17677669
        %v905 = vmul.f32 %v903, 0.17677669
        %v906 = vmul.f32 %v470, %v751
        %v907 = vmul.f32 %v475, %v753
        %v908 = vsel %vm312, %v906, 0.0
        %909 = vadd.xlane.f32.xlu0 %v908
        %v910 = vpop.xlane.xlu0 %909
        %v911 = vsel %vm312, %v907, 0.0
        %912 = vadd.xlane.f32.xlu0 %v911
        %v913 = vpop.xlane.xlu0 %912
        %v914 = vmul.f32 %v910, 0.17677669
        %v915 = vmul.f32 %v913, 0.17677669
        %v916 = vmul.f32 %v470, %v769
        %v917 = vmul.f32 %v475, %v771
        %v918 = vsel %vm312, %v916, 0.0
        %919 = vadd.xlane.f32.xlu0 %v918
        %v920 = vpop.xlane.xlu0 %919
        %v921 = vsel %vm312, %v917, 0.0
        %922 = vadd.xlane.f32.xlu0 %v921
        %v923 = vpop.xlane.xlu0 %922
        %v924 = vmul.f32 %v920, 0.17677669
        %v925 = vmul.f32 %v923, 0.17677669
        %v926 = vmul.f32 %v470, %v787
        %v927 = vmul.f32 %v475, %v789
        %v928 = vsel %vm312, %v926, 0.0
        %929 = vadd.xlane.f32.xlu0 %v928
        %v930 = vpop.xlane.xlu0 %929
        %v931 = vsel %vm312, %v927, 0.0
        %932 = vadd.xlane.f32.xlu0 %v931
        %v933 = vpop.xlane.xlu0 %932
        %v934 = vmul.f32 %v930, 0.17677669
        %v935 = vmul.f32 %v933, 0.17677669
        %v936 = vmul.f32 %v470, %v805
        %v937 = vmul.f32 %v475, %v807
        %v938 = vsel %vm312, %v936, 0.0
        %939 = vadd.xlane.f32.xlu0 %v938
        %v940 = vpop.xlane.xlu0 %939
        %v941 = vsel %vm312, %v937, 0.0
        %942 = vadd.xlane.f32.xlu0 %v941
        %v943 = vpop.xlane.xlu0 %942
        %v944 = vmul.f32 %v940, 0.17677669
        %v945 = vmul.f32 %v943, 0.17677669
        %v946 = vmax.f32 %v904, %v914
        %v947 = vmax.f32 %v905, %v915
        %v948 = vmax.f32 %v946, %v924
        %v949 = vmax.f32 %v947, %v925
        %v950 = vmax.f32 %v948, %v934
        %v951 = vmax.f32 %v949, %v935
        %v952 = vmax.f32 %v950, %v944
        %v953 = vmax.f32 %v951, %v945
        %v954 = vsub.f32 %v904, %v952
        %v955 = vsub.f32 %v905, %v953
        %v956 = vmul.f32 %v954, 1.442695
        %v957 = vpow.pop %v956
        %v958 = vmul.f32 %v955, 1.442695
        %v959 = vpow.pop %v958
        %v960 = vsub.f32 %v914, %v952
        %v961 = vsub.f32 %v915, %v953
        %v962 = vmul.f32 %v960, 1.442695
        %v963 = vpow.pop %v962
        %v964 = vmul.f32 %v961, 1.442695
        %v965 = vpow.pop %v964
        %v966 = vsub.f32 %v924, %v952
        %v967 = vsub.f32 %v925, %v953
        %v968 = vmul.f32 %v966, 1.442695
        %v969 = vpow.pop %v968
        %v970 = vmul.f32 %v967, 1.442695
        %v971 = vpow.pop %v970
        %v972 = vsub.f32 %v934, %v952
        %v973 = vsub.f32 %v935, %v953
        %v974 = vmul.f32 %v972, 1.442695
        %v975 = vpow.pop %v974
        %v976 = vmul.f32 %v973, 1.442695
        %v977 = vpow.pop %v976
        %v978 = vsub.f32 %v944, %v952
        %v979 = vsub.f32 %v945, %v953
        %v980 = vmul.f32 %v978, 1.442695
        %v981 = vpow.pop %v980
        %v982 = vmul.f32 %v979, 1.442695
        %v983 = vpow.pop %v982
        %v984 = vadd.f32 %v957, %v963
        %v985 = vadd.f32 %v959, %v965
        %v986 = vadd.f32 %v984, %v969
        %v987 = vadd.f32 %v985, %v971
        %v988 = vadd.f32 %v986, %v975
        %v989 = vadd.f32 %v987, %v977
        %v990 = vadd.f32 %v988, %v981
        %v991 = vadd.f32 %v989, %v983
        %v992 = vrcp.pop %v990
        %v993 = vrcp.pop %v991
        %v994 = vmul.f32 %v957, %v992
        %v995 = vmul.f32 %v959, %v993
        %v996 = vmul.f32 %v994, %v386
        %v997 = vmul.f32 %v995, %v391
        %v998 = vmul.f32 %v963, %v992
        %v999 = vmul.f32 %v965, %v993
        %v1000 = vmul.f32 %v998, %v470
        %v1001 = vmul.f32 %v999, %v475
        %v1002 = vadd.f32 %v996, %v1000
        %v1003 = vadd.f32 %v997, %v1001
        %v1004 = vmul.f32 %v969, %v992
        %v1005 = vmul.f32 %v971, %v993
        %v1006 = vmul.f32 %v1004, %v554
        %v1007 = vmul.f32 %v1005, %v559
        %v1008 = vadd.f32 %v1002, %v1006
        %v1009 = vadd.f32 %v1003, %v1007
        %v1010 = vmul.f32 %v975, %v992
        %v1011 = vmul.f32 %v977, %v993
        %v1012 = vmul.f32 %v1010, %v638
        %v1013 = vmul.f32 %v1011, %v643
        %v1014 = vadd.f32 %v1008, %v1012
        %v1015 = vadd.f32 %v1009, %v1013
        %v1016 = vmul.f32 %v981, %v992
        %v1017 = vmul.f32 %v983, %v993
        %v1018 = vmul.f32 %v1016, %v722
        %v1019 = vmul.f32 %v1017, %v727
        %v1020 = vadd.f32 %v1014, %v1018
        %v1021 = vadd.f32 %v1015, %v1019
        %v1022 = vadd.f32 %v894, %v1020
        %v1023 = vadd.f32 %v895, %v1021
        %v1024 = vmul.f32 %v554, %v733
        %v1025 = vmul.f32 %v559, %v735
        %v1026 = vsel %vm312, %v1024, 0.0
        %1027 = vadd.xlane.f32.xlu0 %v1026
        %v1028 = vpop.xlane.xlu0 %1027
        %v1029 = vsel %vm312, %v1025, 0.0
        %1030 = vadd.xlane.f32.xlu0 %v1029
        %v1031 = vpop.xlane.xlu0 %1030
        %v1032 = vmul.f32 %v1028, 0.17677669
        %v1033 = vmul.f32 %v1031, 0.17677669
        %v1034 = vmul.f32 %v554, %v751
        %v1035 = vmul.f32 %v559, %v753
        %v1036 = vsel %vm312, %v1034, 0.0
        %1037 = vadd.xlane.f32.xlu0 %v1036
        %v1038 = vpop.xlane.xlu0 %1037
        %v1039 = vsel %vm312, %v1035, 0.0
        %1040 = vadd.xlane.f32.xlu0 %v1039
        %v1041 = vpop.xlane.xlu0 %1040
        %v1042 = vmul.f32 %v1038, 0.17677669
        %v1043 = vmul.f32 %v1041, 0.17677669
        %v1044 = vmul.f32 %v554, %v769
        %v1045 = vmul.f32 %v559, %v771
        %v1046 = vsel %vm312, %v1044, 0.0
        %1047 = vadd.xlane.f32.xlu0 %v1046
        %v1048 = vpop.xlane.xlu0 %1047
        %v1049 = vsel %vm312, %v1045, 0.0
        %1050 = vadd.xlane.f32.xlu0 %v1049
        %v1051 = vpop.xlane.xlu0 %1050
        %v1052 = vmul.f32 %v1048, 0.17677669
        %v1053 = vmul.f32 %v1051, 0.17677669
        %v1054 = vmul.f32 %v554, %v787
        %v1055 = vmul.f32 %v559, %v789
        %v1056 = vsel %vm312, %v1054, 0.0
        %1057 = vadd.xlane.f32.xlu0 %v1056
        %v1058 = vpop.xlane.xlu0 %1057
        %v1059 = vsel %vm312, %v1055, 0.0
        %1060 = vadd.xlane.f32.xlu0 %v1059
        %v1061 = vpop.xlane.xlu0 %1060
        %v1062 = vmul.f32 %v1058, 0.17677669
        %v1063 = vmul.f32 %v1061, 0.17677669
        %v1064 = vmul.f32 %v554, %v805
        %v1065 = vmul.f32 %v559, %v807
        %v1066 = vsel %vm312, %v1064, 0.0
        %1067 = vadd.xlane.f32.xlu0 %v1066
        %v1068 = vpop.xlane.xlu0 %1067
        %v1069 = vsel %vm312, %v1065, 0.0
        %1070 = vadd.xlane.f32.xlu0 %v1069
        %v1071 = vpop.xlane.xlu0 %1070
        %v1072 = vmul.f32 %v1068, 0.17677669
        %v1073 = vmul.f32 %v1071, 0.17677669
        %v1074 = vmax.f32 %v1032, %v1042
        %v1075 = vmax.f32 %v1033, %v1043
        %v1076 = vmax.f32 %v1074, %v1052
        %v1077 = vmax.f32 %v1075, %v1053
        %v1078 = vmax.f32 %v1076, %v1062
        %v1079 = vmax.f32 %v1077, %v1063
        %v1080 = vmax.f32 %v1078, %v1072
        %v1081 = vmax.f32 %v1079, %v1073
        %v1082 = vsub.f32 %v1032, %v1080
        %v1083 = vsub.f32 %v1033, %v1081
        %v1084 = vmul.f32 %v1082, 1.442695
        %v1085 = vpow.pop %v1084
        %v1086 = vmul.f32 %v1083, 1.442695
        %v1087 = vpow.pop %v1086
        %v1088 = vsub.f32 %v1042, %v1080
        %v1089 = vsub.f32 %v1043, %v1081
        %v1090 = vmul.f32 %v1088, 1.442695
        %v1091 = vpow.pop %v1090
        %v1092 = vmul.f32 %v1089, 1.442695
        %v1093 = vpow.pop %v1092
        %v1094 = vsub.f32 %v1052, %v1080
        %v1095 = vsub.f32 %v1053, %v1081
        %v1096 = vmul.f32 %v1094, 1.442695
        %v1097 = vpow.pop %v1096
        %v1098 = vmul.f32 %v1095, 1.442695
        %v1099 = vpow.pop %v1098
        %v1100 = vsub.f32 %v1062, %v1080
        %v1101 = vsub.f32 %v1063, %v1081
        %v1102 = vmul.f32 %v1100, 1.442695
        %v1103 = vpow.pop %v1102
        %v1104 = vmul.f32 %v1101, 1.442695
        %v1105 = vpow.pop %v1104
        %v1106 = vsub.f32 %v1072, %v1080
        %v1107 = vsub.f32 %v1073, %v1081
        %v1108 = vmul.f32 %v1106, 1.442695
        %v1109 = vpow.pop %v1108
        %v1110 = vmul.f32 %v1107, 1.442695
        %v1111 = vpow.pop %v1110
        %v1112 = vadd.f32 %v1085, %v1091
        %v1113 = vadd.f32 %v1087, %v1093
        %v1114 = vadd.f32 %v1112, %v1097
        %v1115 = vadd.f32 %v1113, %v1099
        %v1116 = vadd.f32 %v1114, %v1103
        %v1117 = vadd.f32 %v1115, %v1105
        %v1118 = vadd.f32 %v1116, %v1109
        %v1119 = vadd.f32 %v1117, %v1111
        %v1120 = vrcp.pop %v1118
        %v1121 = vrcp.pop %v1119
        %v1122 = vmul.f32 %v1085, %v1120
        %v1123 = vmul.f32 %v1087, %v1121
        %v1124 = vmul.f32 %v1122, %v386
        %v1125 = vmul.f32 %v1123, %v391
        %v1126 = vmul.f32 %v1091, %v1120
        %v1127 = vmul.f32 %v1093, %v1121
        %v1128 = vmul.f32 %v1126, %v470
        %v1129 = vmul.f32 %v1127, %v475
        %v1130 = vadd.f32 %v1124, %v1128
        %v1131 = vadd.f32 %v1125, %v1129
        %v1132 = vmul.f32 %v1097, %v1120
        %v1133 = vmul.f32 %v1099, %v1121
        %v1134 = vmul.f32 %v1132, %v554
        %v1135 = vmul.f32 %v1133, %v559
        %v1136 = vadd.f32 %v1130, %v1134
        %v1137 = vadd.f32 %v1131, %v1135
        %v1138 = vmul.f32 %v1103, %v1120
        %v1139 = vmul.f32 %v1105, %v1121
        %v1140 = vmul.f32 %v1138, %v638
        %v1141 = vmul.f32 %v1139, %v643
        %v1142 = vadd.f32 %v1136, %v1140
        %v1143 = vadd.f32 %v1137, %v1141
        %v1144 = vmul.f32 %v1109, %v1120
        %v1145 = vmul.f32 %v1111, %v1121
        %v1146 = vmul.f32 %v1144, %v722
        %v1147 = vmul.f32 %v1145, %v727
        %v1148 = vadd.f32 %v1142, %v1146
        %v1149 = vadd.f32 %v1143, %v1147
        %v1150 = vadd.f32 %v1022, %v1148
        %v1151 = vadd.f32 %v1023, %v1149
        %v1152 = vmul.f32 %v638, %v733
        %v1153 = vmul.f32 %v643, %v735
        %v1154 = vsel %vm312, %v1152, 0.0
        %1155 = vadd.xlane.f32.xlu0 %v1154
        %v1156 = vpop.xlane.xlu0 %1155
        %v1157 = vsel %vm312, %v1153, 0.0
        %1158 = vadd.xlane.f32.xlu0 %v1157
        %v1159 = vpop.xlane.xlu0 %1158
        %v1160 = vmul.f32 %v1156, 0.17677669
        %v1161 = vmul.f32 %v1159, 0.17677669
        %v1162 = vmul.f32 %v638, %v751
        %v1163 = vmul.f32 %v643, %v753
        %v1164 = vsel %vm312, %v1162, 0.0
        %1165 = vadd.xlane.f32.xlu0 %v1164
        %v1166 = vpop.xlane.xlu0 %1165
        %v1167 = vsel %vm312, %v1163, 0.0
        %1168 = vadd.xlane.f32.xlu0 %v1167
        %v1169 = vpop.xlane.xlu0 %1168
        %v1170 = vmul.f32 %v1166, 0.17677669
        %v1171 = vmul.f32 %v1169, 0.17677669
        %v1172 = vmul.f32 %v638, %v769
        %v1173 = vmul.f32 %v643, %v771
        %v1174 = vsel %vm312, %v1172, 0.0
        %1175 = vadd.xlane.f32.xlu0 %v1174
        %v1176 = vpop.xlane.xlu0 %1175
        %v1177 = vsel %vm312, %v1173, 0.0
        %1178 = vadd.xlane.f32.xlu0 %v1177
        %v1179 = vpop.xlane.xlu0 %1178
        %v1180 = vmul.f32 %v1176, 0.17677669
        %v1181 = vmul.f32 %v1179, 0.17677669
        %v1182 = vmul.f32 %v638, %v787
        %v1183 = vmul.f32 %v643, %v789
        %v1184 = vsel %vm312, %v1182, 0.0
        %1185 = vadd.xlane.f32.xlu0 %v1184
        %v1186 = vpop.xlane.xlu0 %1185
        %v1187 = vsel %vm312, %v1183, 0.0
        %1188 = vadd.xlane.f32.xlu0 %v1187
        %v1189 = vpop.xlane.xlu0 %1188
        %v1190 = vmul.f32 %v1186, 0.17677669
        %v1191 = vmul.f32 %v1189, 0.17677669
        %v1192 = vmul.f32 %v638, %v805
        %v1193 = vmul.f32 %v643, %v807
        %v1194 = vsel %vm312, %v1192, 0.0
        %1195 = vadd.xlane.f32.xlu0 %v1194
        %v1196 = vpop.xlane.xlu0 %1195
        %v1197 = vsel %vm312, %v1193, 0.0
        %1198 = vadd.xlane.f32.xlu0 %v1197
        %v1199 = vpop.xlane.xlu0 %1198
        %v1200 = vmul.f32 %v1196, 0.17677669
        %v1201 = vmul.f32 %v1199, 0.17677669
        %v1202 = vmax.f32 %v1160, %v1170
        %v1203 = vmax.f32 %v1161, %v1171
        %v1204 = vmax.f32 %v1202, %v1180
        %v1205 = vmax.f32 %v1203, %v1181
        %v1206 = vmax.f32 %v1204, %v1190
        %v1207 = vmax.f32 %v1205, %v1191
        %v1208 = vmax.f32 %v1206, %v1200
        %v1209 = vmax.f32 %v1207, %v1201
        %v1210 = vsub.f32 %v1160, %v1208
        %v1211 = vsub.f32 %v1161, %v1209
        %v1212 = vmul.f32 %v1210, 1.442695
        %v1213 = vpow.pop %v1212
        %v1214 = vmul.f32 %v1211, 1.442695
        %v1215 = vpow.pop %v1214
        %v1216 = vsub.f32 %v1170, %v1208
        %v1217 = vsub.f32 %v1171, %v1209
        %v1218 = vmul.f32 %v1216, 1.442695
        %v1219 = vpow.pop %v1218
        %v1220 = vmul.f32 %v1217, 1.442695
        %v1221 = vpow.pop %v1220
        %v1222 = vsub.f32 %v1180, %v1208
        %v1223 = vsub.f32 %v1181, %v1209
        %v1224 = vmul.f32 %v1222, 1.442695
        %v1225 = vpow.pop %v1224
        %v1226 = vmul.f32 %v1223, 1.442695
        %v1227 = vpow.pop %v1226
        %v1228 = vsub.f32 %v1190, %v1208
        %v1229 = vsub.f32 %v1191, %v1209
        %v1230 = vmul.f32 %v1228, 1.442695
        %v1231 = vpow.pop %v1230
        %v1232 = vmul.f32 %v1229, 1.442695
        %v1233 = vpow.pop %v1232
        %v1234 = vsub.f32 %v1200, %v1208
        %v1235 = vsub.f32 %v1201, %v1209
        %v1236 = vmul.f32 %v1234, 1.442695
        %v1237 = vpow.pop %v1236
        %v1238 = vmul.f32 %v1235, 1.442695
        %v1239 = vpow.pop %v1238
        %v1240 = vadd.f32 %v1213, %v1219
        %v1241 = vadd.f32 %v1215, %v1221
        %v1242 = vadd.f32 %v1240, %v1225
        %v1243 = vadd.f32 %v1241, %v1227
        %v1244 = vadd.f32 %v1242, %v1231
        %v1245 = vadd.f32 %v1243, %v1233
        %v1246 = vadd.f32 %v1244, %v1237
        %v1247 = vadd.f32 %v1245, %v1239
        %v1248 = vrcp.pop %v1246
        %v1249 = vrcp.pop %v1247
        %v1250 = vmul.f32 %v1213, %v1248
        %v1251 = vmul.f32 %v1215, %v1249
        %v1252 = vmul.f32 %v1250, %v386
        %v1253 = vmul.f32 %v1251, %v391
        %v1254 = vmul.f32 %v1219, %v1248
        %v1255 = vmul.f32 %v1221, %v1249
        %v1256 = vmul.f32 %v1254, %v470
        %v1257 = vmul.f32 %v1255, %v475
        %v1258 = vadd.f32 %v1252, %v1256
        %v1259 = vadd.f32 %v1253, %v1257
        %v1260 = vmul.f32 %v1225, %v1248
        %v1261 = vmul.f32 %v1227, %v1249
        %v1262 = vmul.f32 %v1260, %v554
        %v1263 = vmul.f32 %v1261, %v559
        %v1264 = vadd.f32 %v1258, %v1262
        %v1265 = vadd.f32 %v1259, %v1263
        %v1266 = vmul.f32 %v1231, %v1248
        %v1267 = vmul.f32 %v1233, %v1249
        %v1268 = vmul.f32 %v1266, %v638
        %v1269 = vmul.f32 %v1267, %v643
        %v1270 = vadd.f32 %v1264, %v1268
        %v1271 = vadd.f32 %v1265, %v1269
        %v1272 = vmul.f32 %v1237, %v1248
        %v1273 = vmul.f32 %v1239, %v1249
        %v1274 = vmul.f32 %v1272, %v722
        %v1275 = vmul.f32 %v1273, %v727
        %v1276 = vadd.f32 %v1270, %v1274
        %v1277 = vadd.f32 %v1271, %v1275
        %v1278 = vadd.f32 %v1150, %v1276
        %v1279 = vadd.f32 %v1151, %v1277
        %v1280 = vmul.f32 %v722, %v733
        %v1281 = vmul.f32 %v727, %v735
        %v1282 = vsel %vm312, %v1280, 0.0
        %1283 = vadd.xlane.f32.xlu0 %v1282
        %v1284 = vpop.xlane.xlu0 %1283
        %v1285 = vsel %vm312, %v1281, 0.0
        %1286 = vadd.xlane.f32.xlu0 %v1285
        %v1287 = vpop.xlane.xlu0 %1286
        %v1288 = vmul.f32 %v1284, 0.17677669
        %v1289 = vmul.f32 %v1287, 0.17677669
        %v1290 = vmul.f32 %v722, %v751
        %v1291 = vmul.f32 %v727, %v753
        %v1292 = vsel %vm312, %v1290, 0.0
        %1293 = vadd.xlane.f32.xlu0 %v1292
        %v1294 = vpop.xlane.xlu0 %1293
        %v1295 = vsel %vm312, %v1291, 0.0
        %1296 = vadd.xlane.f32.xlu0 %v1295
        %v1297 = vpop.xlane.xlu0 %1296
        %v1298 = vmul.f32 %v1294, 0.17677669
        %v1299 = vmul.f32 %v1297, 0.17677669
        %v1300 = vmul.f32 %v722, %v769
        %v1301 = vmul.f32 %v727, %v771
        %v1302 = vsel %vm312, %v1300, 0.0
        %1303 = vadd.xlane.f32.xlu0 %v1302
        %v1304 = vpop.xlane.xlu0 %1303
        %v1305 = vsel %vm312, %v1301, 0.0
        %1306 = vadd.xlane.f32.xlu0 %v1305
        %v1307 = vpop.xlane.xlu0 %1306
        %v1308 = vmul.f32 %v1304, 0.17677669
        %v1309 = vmul.f32 %v1307, 0.17677669
        %v1310 = vmul.f32 %v722, %v787
        %v1311 = vmul.f32 %v727, %v789
        %v1312 = vsel %vm312, %v1310, 0.0
        %1313 = vadd.xlane.f32.xlu0 %v1312
        %v1314 = vpop.xlane.xlu0 %1313
        %v1315 = vsel %vm312, %v1311, 0.0
        %1316 = vadd.xlane.f32.xlu0 %v1315
        %v1317 = vpop.xlane.xlu0 %1316
        %v1318 = vmul.f32 %v1314, 0.17677669
        %v1319 = vmul.f32 %v1317, 0.17677669
        %v1320 = vmul.f32 %v722, %v805
        %v1321 = vmul.f32 %v727, %v807
        %v1322 = vsel %vm312, %v1320, 0.0
        %1323 = vadd.xlane.f32.xlu0 %v1322
        %v1324 = vpop.xlane.xlu0 %1323
        %v1325 = vsel %vm312, %v1321, 0.0
        %1326 = vadd.xlane.f32.xlu0 %v1325
        %v1327 = vpop.xlane.xlu0 %1326
        %v1328 = vmul.f32 %v1324, 0.17677669
        %v1329 = vmul.f32 %v1327, 0.17677669
        %v1330 = vmax.f32 %v1288, %v1298
        %v1331 = vmax.f32 %v1289, %v1299
        %v1332 = vmax.f32 %v1330, %v1308
        %v1333 = vmax.f32 %v1331, %v1309
        %v1334 = vmax.f32 %v1332, %v1318
        %v1335 = vmax.f32 %v1333, %v1319
        %v1336 = vmax.f32 %v1334, %v1328
        %v1337 = vmax.f32 %v1335, %v1329
        %v1338 = vsub.f32 %v1288, %v1336
        %v1339 = vsub.f32 %v1289, %v1337
        %v1340 = vmul.f32 %v1338, 1.442695
        %v1341 = vpow.pop %v1340
        %v1342 = vmul.f32 %v1339, 1.442695
        %v1343 = vpow.pop %v1342
        %v1344 = vsub.f32 %v1298, %v1336
        %v1345 = vsub.f32 %v1299, %v1337
        %v1346 = vmul.f32 %v1344, 1.442695
        %v1347 = vpow.pop %v1346
        %v1348 = vmul.f32 %v1345, 1.442695
        %v1349 = vpow.pop %v1348
        %v1350 = vsub.f32 %v1308, %v1336
        %v1351 = vsub.f32 %v1309, %v1337
        %v1352 = vmul.f32 %v1350, 1.442695
        %v1353 = vpow.pop %v1352
        %v1354 = vmul.f32 %v1351, 1.442695
        %v1355 = vpow.pop %v1354
        %v1356 = vsub.f32 %v1318, %v1336
        %v1357 = vsub.f32 %v1319, %v1337
        %v1358 = vmul.f32 %v1356, 1.442695
        %v1359 = vpow.pop %v1358
        %v1360 = vmul.f32 %v1357, 1.442695
        %v1361 = vpow.pop %v1360
        %v1362 = vsub.f32 %v1328, %v1336
        %v1363 = vsub.f32 %v1329, %v1337
        %v1364 = vmul.f32 %v1362, 1.442695
        %v1365 = vpow.pop %v1364
        %v1366 = vmul.f32 %v1363, 1.442695
        %v1367 = vpow.pop %v1366
        %v1368 = vadd.f32 %v1341, %v1347
        %v1369 = vadd.f32 %v1343, %v1349
        %v1370 = vadd.f32 %v1368, %v1353
        %v1371 = vadd.f32 %v1369, %v1355
        %v1372 = vadd.f32 %v1370, %v1359
        %v1373 = vadd.f32 %v1371, %v1361
        %v1374 = vadd.f32 %v1372, %v1365
        %v1375 = vadd.f32 %v1373, %v1367
        %v1376 = vrcp.pop %v1374
        %v1377 = vrcp.pop %v1375
        %v1378 = vmul.f32 %v1341, %v1376
        %v1379 = vmul.f32 %v1343, %v1377
        %v1380 = vmul.f32 %v1378, %v386
        %v1381 = vmul.f32 %v1379, %v391
        %v1382 = vmul.f32 %v1347, %v1376
        %v1383 = vmul.f32 %v1349, %v1377
        %v1384 = vmul.f32 %v1382, %v470
        %v1385 = vmul.f32 %v1383, %v475
        %v1386 = vadd.f32 %v1380, %v1384
        %v1387 = vadd.f32 %v1381, %v1385
        %v1388 = vmul.f32 %v1353, %v1376
        %v1389 = vmul.f32 %v1355, %v1377
        %v1390 = vmul.f32 %v1388, %v554
        %v1391 = vmul.f32 %v1389, %v559
        %v1392 = vadd.f32 %v1386, %v1390
        %v1393 = vadd.f32 %v1387, %v1391
        %v1394 = vmul.f32 %v1359, %v1376
        %v1395 = vmul.f32 %v1361, %v1377
        %v1396 = vmul.f32 %v1394, %v638
        %v1397 = vmul.f32 %v1395, %v643
        %v1398 = vadd.f32 %v1392, %v1396
        %v1399 = vadd.f32 %v1393, %v1397
        %v1400 = vmul.f32 %v1365, %v1376
        %v1401 = vmul.f32 %v1367, %v1377
        %v1402 = vmul.f32 %v1400, %v722
        %v1403 = vmul.f32 %v1401, %v727
        %v1404 = vadd.f32 %v1398, %v1402
        %v1405 = vadd.f32 %v1399, %v1403
        %v1406 = vadd.f32 %v1278, %v1404
        %v1407 = vadd.f32 %v1279, %v1405
        %v1408 = vmul.f32 %v1406, 0.2
        %v1409 = vmul.f32 %v1407, 0.2
        %v1410 = vld [vmem:[#allocation7] sm:$0xff]
        %v1411 = vld [vmem:[#allocation7 + $0x8] sm:$0xff]
        %v1412 = vld [vmem:[#allocation7 + $0x10] sm:$0xff]
        %v1413 = vld [vmem:[#allocation7 + $0x18] sm:$0xff]
        %v1414 = vld [vmem:[%s4] sm:$0x1]
        %v1416 = vlaneseq
        %v1417 = vshrl.u32 %v1416, 7
        %v1418 = vsub.s32 0, %v1417
        %v1419 = vrot.slane %v1414, %v1418
        %1423 = vrot.lane.b32.xlu0 %v1408, 64
        %v1424 = vpop.permute.xlu0 %1423
        %1425 = vrot.lane.b32.xlu0 %v1409, 64
        %v1426 = vpop.permute.xlu0 %1425
        %v1427 = vsel %vm312, %v1424, 0
        %v1429 = vsel %vm312, %v1426, 0
        %1431 = vmatprep.subr.mxu0 0.0
        %1432 = vmatpush1.msra.mxu0 %v1410
        %1433 = vmatprep.subr.mxu0 0.0
        %1434 = vmatpush1.msra.mxu0 %v1411
        %1435 = vmatprep.subr.mxu0 0.0
        %1436 = vmatpush1.msra.mxu0 %v1412
        %1437 = vmatprep.subr.mxu0 0.0
        %1438 = vmatpush1.msra.mxu0 %v1413
        %1439 = vmatprep.subr.mxu0 0.0
        %1440 = vmatpush1.msra.mxu0 0.0
        %1441 = vmatprep.subr.mxu0 0.0
        %1442 = vmatpush1.msra.mxu0 0.0
        %1443 = vmatprep.subr.mxu0 0.0
        %1444 = vmatpush1.msra.mxu0 0.0
        %1445 = vmatprep.subr.mxu0 0.0
        %1446 = vmatpush1.msra.mxu0 0.0
        %1447 = vmatprep.subr.mxu0 0.0
        %1448 = vmatpush1.msra.mxu0 0.0
        %1449 = vmatprep.subr.mxu0 0.0
        %1450 = vmatpush1.msra.mxu0 0.0
        %1451 = vmatprep.subr.mxu0 0.0
        %1452 = vmatpush1.msra.mxu0 0.0
        %1453 = vmatprep.subr.mxu0 0.0
        %1454 = vmatpush1.msra.mxu0 0.0
        %1455 = vmatprep.subr.mxu0 0.0
        %1456 = vmatpush1.msra.mxu0 0.0
        %1457 = vmatprep.subr.mxu0 0.0
        %1458 = vmatpush1.msra.mxu0 0.0
        %1459 = vmatprep.subr.mxu0 0.0
        %1460 = vmatpush1.msra.mxu0 0.0
        %1461 = vmatprep.subr.mxu0 0.0
        %1462 = vmatpush1.msra.mxu0 0.0
        %1463 = vmatprep.subr.mxu0 0.0
        %1464 = vmatpush1.msra.mxu0 0.0
        %1465 = vmatprep.subr.mxu0 0.0
        %1466 = vmatpush1.msra.mxu0 0.0
        %1467 = vmatprep.subr.mxu0 0.0
        %1468 = vmatpush1.msra.mxu0 0.0
        %1469 = vmatprep.subr.mxu0 0.0
        %1470 = vmatpush1.msra.mxu0 0.0
        %1471 = vmatprep.subr.mxu0 0.0
        %1472 = vmatpush1.msra.mxu0 0.0
        %1473 = vmatprep.subr.mxu0 0.0
        %1474 = vmatpush1.msra.mxu0 0.0
        %1475 = vmatprep.subr.mxu0 0.0
        %1476 = vmatpush1.msra.mxu0 0.0
        %1477 = vmatprep.subr.mxu0 0.0
        %1478 = vmatpush1.msra.mxu0 0.0
        %1479 = vmatprep.subr.mxu0 0.0
        %1480 = vmatpush1.msra.mxu0 0.0
        %1481 = vmatprep.subr.mxu0 0.0
        %1482 = vmatpush1.msra.mxu0 0.0
        %1483 = vmatprep.subr.mxu0 0.0
        %1484 = vmatpush1.msra.mxu0 0.0
        %1485 = vmatprep.subr.mxu0 0.0
        %1486 = vmatpush1.msra.mxu0 0.0
        %1487 = vmatprep.subr.mxu0 0.0
        %1488 = vmatpush1.msra.mxu0 0.0
        %1489 = vmatprep.subr.mxu0 0.0
        %1490 = vmatpush1.msra.mxu0 0.0
        %1491 = vmatprep.subr.mxu0 0.0
        %1492 = vmatpush1.msra.mxu0 0.0
        %1493 = vmatprep.subr.mxu0 0.0
        %1494 = vmatpush1.msra.mxu0 0.0
        %1495 = vmatprep.mubr.f32.mxu0 0.0
        %1496 = vmatmul.mubr.f32.gmra.mrb[0].mxu0 %v1427
        %v1497 = vpop.f32.mrb[0].mxu0
        %v1498 = vadd.f32 %v1419, %v1497
        %v1499 = vpop.f32.mrb[0].mxu0
        %1500 = vmatprep.mubr.f32.mxu0 0.0
        %1501 = vmatmul.mubr.f32.gmra.mrb[0].mxu0 %v1429
        %v1502 = vpop.f32.mrb[0].mxu0
        %v1503 = vadd.f32 %v1419, %v1502
        %v1504 = vpop.f32.mrb[0].mxu0
        %1505 = vdwg.mxu0
        %1506 = vst.msk [vmem:[%s296] sm:$0xff] %vm312, %v1498
        %1507 = vst.msk [vmem:[%s296 + $0x8] sm:$0xff] %vm312, %v1503
        %s1508 = sand.u32 %s141, 1
        %s1509 = scalar_lea.sflag [#allocation4], %s1508
        %s1510 = sand.u32 %s141, 1
        %s1511 = smul.addr %s1510, 16
        %s1512 = scalar_lea.vmem [#allocation8], %s1511
        // Predicated region
        $region53: #{tpu_custom_call.1} parent=39 // pred_check
          %p1513 = pneg %p151
        $region54: #{tpu_custom_call.1} parent=39 // pred_check_branch
          %1515 = sbr.rel (%p1513) target = $region56
        $region55: #{tpu_custom_call.1} parent=39 // pred_region
          %s1516 = smul.u32 2, %s23
          %s1518 = ssub.s32 256, 256
          %1519 = vsyncadd %s1509, %s1518
          %s1520 = smul.addr %s1516, 128
          %s1521 = scalar_lea.hbm %s5, %s1520
          %s1522 = sshll.u32 %s1512, 4
          %s1523 = int_to_ptr.vmem [resolvable:$true] %s1522
          %1528 = dma.vmem_to_hbm [thread:$0]  %s1523, 256, %s1521, %s1509, 128, 128, 8
        $region56: #{tpu_custom_call.1} parent=39 // pred_fallthru
          _
      $region40: #{tpu_custom_call.1} parent=5 // pred_fallthru
        _
      %p1529 = scmp.le.s32.totalorder 2, %s18
      // Predicated region
      $region57: #{tpu_custom_call.1} parent=5 // pred_check
        %p1530 = pneg %p1529
      $region58: #{tpu_custom_call.1} parent=5 // pred_check_branch
        %1532 = sbr.rel (%p1530) target = $region60
      $region59: #{tpu_custom_call.1} parent=5 // pred_region
        %s1533 = ssub.s32 %s18, 2
        // Predicated region
        $region61: #{tpu_custom_call.1} parent=59 // pred_check
          %p1534 = pneg %p157
        $region62: #{tpu_custom_call.1} parent=59 // pred_check_branch
          %1536 = sbr.rel (%p1534) target = $region64
        $region63: #{tpu_custom_call.1} parent=59 // pred_region
          %s1537 = sand.u32 %s142, 1
          %s1538 = scalar_lea.sflag [#allocation4], %s1537
          %s1539 = sand.u32 %s142, 1
          %s1540 = smul.addr %s1539, 16
          %s1541 = scalar_lea.vmem [#allocation8], %s1540
          %1542 = dma.done %s1538, 256
        $region64: #{tpu_custom_call.1} parent=59 // pred_fallthru
          _
      $region60: #{tpu_custom_call.1} parent=5 // pred_fallthru
        _
    $region6: #{tpu_custom_call.1} parent=1 // loop_footer
      %s22 = sadd.s32 1, %s18
    $region7: #{tpu_custom_call.1} parent=1 // loop_footer_branch
      %17 = sbr.rel target = $region3
    $region8: #{tpu_custom_call.1} parent=1 // loop_exit
      _
    %1543 = vsyncpa [#allocation3], 1
    %s1544 = scalar_lea.sflag [#allocation3], 1
    %1545 = vsyncpa %s1544, 1
    %1546 = vsyncpa [#allocation6], 1
    %1547 = vsyncpa [#allocation4], 1
    %s1548 = scalar_lea.sflag [#allocation4], 1
    %1549 = vsyncpa %s1548, 1

</llo_original>
